<compile_context>
chip_gen: v7x
topology: tpu7x:2x2x1
jax: 0.10.0
libtpu: 0.0.40
codegen_flags: <defaults>
</compile_context>

<pallas_src>
import math
import functools

import jax
import jax.numpy as jnp
from jax.experimental import pallas as pl
from jax.experimental.pallas import tpu as pltpu

EPS = 1e-10
NEG_BIG = -1e30          # finite "-inf" sentinel: keeps fully-padded tiles NaN-free


def _round_up(a, b):
    return ((a + b - 1) // b) * b


def _make_mine_kernel(num_mid, n_valid, tm, tiles_per_core):
    """Fused lane-packed MLP + online (mean, logsumexp) reduction kernel.

    Ref order:
      xyy, W1, b1, [W2..W_{L-1}], [b2..b_{L-1}], w_last_joint, w_last_marg,
      b_last, sum_out, max_out, sumexp_out, sum_sc, max_sc, sumexp_sc
    """
    n_in = 6 + 2 * num_mid

    def kernel(*refs):
        xyy_ref, w1_ref, b1_ref = refs[:3]
        mid_w = refs[3:3 + num_mid]
        mid_b = refs[3 + num_mid:3 + 2 * num_mid]
        wlj_ref = refs[3 + 2 * num_mid]
        wlm_ref = refs[4 + 2 * num_mid]
        blast_ref = refs[5 + 2 * num_mid]
        sum_out, max_out, se_out = refs[n_in:n_in + 3]
        sum_sc, m_sc, s_sc = refs[n_in + 3:]

        c = pl.program_id(0)          # "parallel" (core) axis
        i = pl.program_id(1)          # "arbitrary" (batch-tile) axis

        @pl.when(i == 0)
        def _init():
            sum_sc[...] = jnp.zeros_like(sum_sc)
            m_sc[...] = jnp.full_like(m_sc, NEG_BIG)
            s_sc[...] = jnp.zeros_like(s_sc)

        # ---- layer 1: one dot over the lane-packed [x | y | y_perm] input ----
        w1 = w1_ref[...]
        h = jnp.dot(xyy_ref[...].astype(w1.dtype), w1,
                    preferred_element_type=jnp.float32) + b1_ref[...]
        # TODO(synk): tanh GELU (EUP path) deviates slightly from PyTorch's
        # exact erf GELU (torch.nn.GELU default); acceptable for the estimator.
        h = jax.nn.gelu(h, approximate=True)

        # ---- hidden layers 2..L-1: block-diagonal weights keep joint/marginal
        # packed along lanes, one dot per layer ----
        for k in range(num_mid):
            w = mid_w[k][...]
            h = jnp.dot(h.astype(w.dtype), w,
                        preferred_element_type=jnp.float32) + mid_b[k][...]
            h = jax.nn.gelu(h, approximate=True)

        # ---- valid-row mask for zero-padded trailing tiles ----
        row0 = (c * tiles_per_core + i) * tm
        row = row0 + jax.lax.broadcasted_iota(jnp.int32, (tm, 1), 0)
        valid = row < n_valid

        # ---- joint half: mean is linear in the last layer, so reduce the
        # lane-dense slab over rows first, then one tiny lane dot ----
        colsum = jnp.sum(jnp.where(valid, h, 0.0), axis=0, keepdims=True)
        count = jnp.sum(valid.astype(jnp.float32), axis=0, keepdims=True)
        sum_sc[...] += (jnp.sum(colsum * wlj_ref[...], axis=-1, keepdims=True)
                        + count * blast_ref[...])

        # ---- marginal half: per-row T + online (max, rescaled sum-exp) lse ----
        t_marg = (jnp.sum(h * wlm_ref[...], axis=-1, keepdims=True)
                  + blast_ref[...])
        t_m = jnp.where(valid, t_marg, NEG_BIG)
        tile_max = jnp.max(t_m, axis=0, keepdims=True)
        m_old = m_sc[...]
        m_new = jnp.maximum(m_old, tile_max)
        s_sc[...] = (s_sc[...] * jnp.exp(m_old - m_new)
                     + jnp.sum(jnp.exp(t_m - m_new), axis=0, keepdims=True))
        m_sc[...] = m_new

        # ---- finalize: write per-core partials once, on the last tile ----
        @pl.when(i == pl.num_programs(1) - 1)
        def _finalize():
            sum_out[...] = jnp.broadcast_to(sum_sc[...], (8, 128))
            max_out[...] = jnp.broadcast_to(m_sc[...], (8, 128))
            se_out[...] = jnp.broadcast_to(s_sc[...], (8, 128))

    return kernel


def _mine_stats_pallas(xyy, n_valid, w1c, b1c, mid_ws, mid_bs, wlj, wlm, b_last,
                       *, tile_rows, n_splits):
    """Returns (t, lse): mean of T(joint) and logsumexp over rows of T(marg)."""
    n_rows, din = xyy.shape
    num_mid = len(mid_ws)

    # Batch tile: as large as reasonable (per-step overhead dominates otherwise),
    # multiple of 8 sublanes.
    tm = max(8, min(int(tile_rows), _round_up(n_valid, 8)))
    tiles_total = -(-n_valid // tm)
    tiles_per_core = -(-tiles_total // n_splits)
    n_pad = n_splits * tiles_per_core * tm
    if n_pad != n_rows:
        xyy = jnp.pad(xyy, ((0, n_pad - n_rows), (0, 0)))

    params = [w1c, b1c, *mid_ws, *mid_bs, wlj, wlm, b_last]

    def data_map(c, i):
        return (c * tiles_per_core + i, 0)

    in_specs = ([pl.BlockSpec((tm, din), data_map)]
                + [pl.BlockSpec(p.shape, lambda c, i: (0, 0)) for p in params])

    out_shape = jax.ShapeDtypeStruct((n_splits * 8, 128), jnp.float32)
    out_spec = pl.BlockSpec((8, 128), lambda c, i: (c, 0))

    kernel = _make_mine_kernel(num_mid, n_valid, tm, tiles_per_core)

    sum_p, max_p, se_p = pl.pallas_call(
        kernel,
        out_shape=(out_shape, out_shape, out_shape),
        grid_spec=pltpu.PrefetchScalarGridSpec(
            num_scalar_prefetch=0,
            grid=(n_splits, tiles_per_core),
            in_specs=in_specs,
            out_specs=(out_spec, out_spec, out_spec),
            scratch_shapes=[pltpu.VMEM((1, 1), jnp.float32),
                            pltpu.VMEM((1, 1), jnp.float32),
                            pltpu.VMEM((1, 1), jnp.float32)]),
        compiler_params=pltpu.CompilerParams(
            dimension_semantics=("parallel", "arbitrary"),
            vmem_limit_bytes=32 * 1024 * 1024),
    )(xyy, *params)

    part_sum = sum_p.reshape(n_splits, 8, 128)[:, 0, 0]
    part_max = max_p.reshape(n_splits, 8, 128)[:, 0, 0]
    part_se = se_p.reshape(n_splits, 8, 128)[:, 0, 0]

    t = jnp.sum(part_sum) / float(n_valid)
    m_g = jnp.max(part_max)
    # Cores whose rows were all padding have part_max == NEG_BIG -> weight 0.
    lse = m_g + jnp.log(jnp.sum(part_se * jnp.exp(part_max - m_g)))
    return t, lse


@functools.partial(jax.jit, static_argnames=("loss_type", "tile_rows",
                                              "matmul_dtype", "n_splits"))
def mine_forward(x, y, perm, weights, biases, running_mean, *,
                 loss_type="mine", alpha=0.01, reg_weight=0.1, target_val=0.0,
                 tile_rows=2048, matmul_dtype=jnp.bfloat16, n_splits=2):
    """Reproduces MineModel.forward: returns (loss, mi, new_running_mean)."""
    n, dx = x.shape
    dy = y.shape[1]
    mm_dt = jnp.dtype(matmul_dtype)

    # y_marg = y[perm]; gathered + lane-packed with x,y in the wrapper so the
    # kernel sees a single input stream.  The joint/marginal MLP batches are
    # never materialized in HBM.
    # TODO(synk): gather y[perm] in-kernel via scalar-prefetched row indices to
    # remove this (n, dx+2dy) materialization entirely (modest win at dy=4).
    xyy = jnp.concatenate([x, y, y[perm]], axis=1)            # (n, dx+2dy)

    # --- layer 1: combined weight acting on [x | y | y_perm], producing the
    # lane-packed (.., 2*H1) activation [joint | marginal] ---
    w1, b1 = weights[0], biases[0]                            # (dx+dy, H1), (1, H1)
    w1_x, w1_y = w1[:dx], w1[dx:]
    zy = jnp.zeros_like(w1_y)
    w1_joint = jnp.concatenate([w1_x, w1_y, zy], axis=0)      # (dx+2dy, H1)
    w1_marg = jnp.concatenate([w1_x, zy, w1_y], axis=0)       # (dx+2dy, H1)
    w1c = jnp.concatenate([w1_joint, w1_marg], axis=1).astype(mm_dt)
    b1c = jnp.concatenate([b1, b1], axis=1)                   # (1, 2*H1) f32

    # --- mid layers: block-diagonal weights (pre-cast once to the MXU dtype) ---
    mid_ws, mid_bs = [], []
    for w, b in zip(weights[1:-1], biases[1:-1]):
        z = jnp.zeros_like(w)
        wbd = jnp.concatenate([jnp.concatenate([w, z], axis=1),
                               jnp.concatenate([z, w], axis=1)], axis=0)
        mid_ws.append(wbd.astype(mm_dt))
        mid_bs.append(jnp.concatenate([b, b], axis=1))

    # --- last (h_last -> 1) layer as a VPU multiply + lane reduction ---
    w_last = jnp.reshape(weights[-1], (1, -1))                # (1, h_last) f32
    zl = jnp.zeros_like(w_last)
    wlj = jnp.concatenate([w_last, zl], axis=1)               # joint lanes
    wlm = jnp.concatenate([zl, w_last], axis=1)               # marginal lanes
    b_last = biases[-1]                                       # (1, 1) f32

    t, lse = _mine_stats_pallas(
        xyy, n, w1c, b1c, tuple(mid_ws), tuple(mid_bs), wlj, wlm, b_last,
        tile_rows=tile_rows, n_splits=n_splits)

    log_n = math.log(n)
    log_mean_exp = lse - log_n          # == log(mean(exp(t_marg)))

    if loss_type == "mine":
        # EMALoss forward value is log(mean(exp(t_marg)));
        # running_mean tracks an EMA of mean(exp(t_marg)).
        t_exp = jnp.exp(log_mean_exp)
        new_running_mean = jnp.where(
            running_mean == 0,
            t_exp,
            alpha * t_exp + (1.0 - alpha) * running_mean)
        second_term = log_mean_exp
        mi = t - second_term
        loss = -mi
    elif loss_type == "fdiv":
        second_term = jnp.exp(log_mean_exp - 1.0)   # mean(exp(t_marg - 1))
        mi = t - second_term
        loss = -mi
        new_running_mean = running_mean
    elif loss_type == "remine":
        second_term = log_mean_exp
        mi = t - second_term
        loss = -mi + reg_weight * jnp.square(second_term - target_val)
        new_running_mean = running_mean
    else:
        second_term = log_mean_exp
        mi = t - second_term
        loss = -mi
        new_running_mean = running_mean

    return loss, mi, new_running_mean


def init_params(key, input_dim, hidden_layers):
    """Deterministic init: Linear(in, h0) gelu ... Linear(h_last, 1).

    Weights are stored transposed w.r.t. PyTorch nn.Linear, i.e. (in, out),
    so the kernel computes h = x @ W + b directly on the MXU.
    """
    dims = [input_dim] + list(hidden_layers) + [1]
    weights, biases = [], []
    for i in range(len(dims) - 1):
        key, kw, kb = jax.random.split(key, 3)
        bound = 1.0 / math.sqrt(dims[i])
        w = jax.random.uniform(kw, (dims[i], dims[i + 1]), jnp.float32,
                               minval=-bound, maxval=bound)
        b = jax.random.uniform(kb, (1, dims[i + 1]), jnp.float32,
                               minval=-bound, maxval=bound)
        weights.append(w)
        biases.append(b)
    return tuple(weights), tuple(biases)


def _mine_reference(x, y, perm, weights, biases):
    """Pure-JAX reference of the 'mine' branch forward values (tanh GELU,
    default matmul precision — matches the kernel's math)."""
    joint = jnp.concatenate([x, y], axis=1)
    marg = jnp.concatenate([x, y[perm]], axis=1)

    def mlp(h):
        for i, (w, b) in enumerate(zip(weights, biases)):
            h = jnp.dot(h, w) + b
            if i < len(weights) - 1:
                h = jax.nn.gelu(h, approximate=True)
        return h

    t = jnp.mean(mlp(joint))
    tm_ = mlp(marg)
    second = jax.scipy.special.logsumexp(tm_, axis=0)[0] - math.log(x.shape[0])
    mi = t - second
    return -mi, mi


if __name__ == "__main__":
    key = jax.random.PRNGKey(0)
    k_x, k_y, k_perm, k_params = jax.random.split(key, 4)

    N, dim_x, dim_y = 8, 4, 4
    input_dim = dim_x + dim_y                     # model sees cat(x, y)
    hidden_layers = [64, 32, 16, 8]

    x = jax.random.normal(k_x, (N, dim_x), jnp.float32)
    y = jax.random.normal(k_y, (N, dim_y), jnp.float32)
    perm = jax.random.permutation(k_perm, N)      # y_marg = y[perm]

    weights, biases = init_params(k_params, input_dim, hidden_layers)
    running_mean0 = jnp.float32(0.0)

    loss_ref, mi_ref = _mine_reference(x, y, perm, weights, biases)

    # --- f32 MXU-input path: tight match to the JAX reference ---
    loss, mi, running_mean = mine_forward(
        x, y, perm, weights, biases, running_mean0,
        loss_type="mine", alpha=0.01, matmul_dtype=jnp.float32)
    jax.block_until_ready((loss, mi, running_mean))
    assert jnp.allclose(loss, loss_ref, rtol=1e-3, atol=1e-3), (loss, loss_ref)
    assert jnp.allclose(mi, mi_ref, rtol=1e-3, atol=1e-3), (mi, mi_ref)

    # --- bf16 MXU path (perf default on all generations): looser tolerance ---
    loss_bf, mi_bf, _ = mine_forward(
        x, y, perm, weights, biases, running_mean0,
        loss_type="mine", alpha=0.01)
    jax.block_until_ready((loss_bf, mi_bf))
    assert jnp.allclose(loss_bf, loss_ref, rtol=5e-2, atol=5e-2), (loss_bf, loss_ref)

    # --- exercise the tiled + masked online-logsumexp path (N not a multiple
    #     of the tile size, padded tiles on the second core split) ---
    k_x2, k_y2, k_p2 = jax.random.split(jax.random.PRNGKey(1), 3)
    N2 = 1000
    x2 = jax.random.normal(k_x2, (N2, dim_x), jnp.float32)
    y2 = jax.random.normal(k_y2, (N2, dim_y), jnp.float32)
    perm2 = jax.random.permutation(k_p2, N2)
    loss2, mi2, _ = mine_forward(
        x2, y2, perm2, weights, biases, running_mean0,
        loss_type="mine", alpha=0.01, tile_rows=256, matmul_dtype=jnp.float32)
    jax.block_until_ready((loss2, mi2))
    loss2_ref, mi2_ref = _mine_reference(x2, y2, perm2, weights, biases)
    assert jnp.allclose(loss2, loss2_ref, rtol=1e-3, atol=1e-3), (loss2, loss2_ref)
    assert jnp.allclose(mi2, mi2_ref, rtol=1e-3, atol=1e-3), (mi2, mi2_ref)

    print("KERNEL_OK")
</pallas_src>

<mosaic_0001>
module attributes {stable_mosaic.version = 11 : i64} {
  func.func @kernel(%arg0: i32, %arg1: i32, %arg2: memref<8x12xf32, #tpu.memory_space<vmem>>, %arg3: memref<12x128xf32, #tpu.memory_space<vmem>>, %arg4: memref<1x128xf32, #tpu.memory_space<vmem>>, %arg5: memref<128x64xf32, #tpu.memory_space<vmem>>, %arg6: memref<64x32xf32, #tpu.memory_space<vmem>>, %arg7: memref<32x16xf32, #tpu.memory_space<vmem>>, %arg8: memref<1x64xf32, #tpu.memory_space<vmem>>, %arg9: memref<1x32xf32, #tpu.memory_space<vmem>>, %arg10: memref<1x16xf32, #tpu.memory_space<vmem>>, %arg11: memref<1x16xf32, #tpu.memory_space<vmem>>, %arg12: memref<1x16xf32, #tpu.memory_space<vmem>>, %arg13: memref<1x1xf32, #tpu.memory_space<vmem>>, %arg14: memref<8x128xf32, #tpu.memory_space<vmem>>, %arg15: memref<8x128xf32, #tpu.memory_space<vmem>>, %arg16: memref<8x128xf32, #tpu.memory_space<vmem>>, %arg17: memref<1x1xf32, #tpu.memory_space<vmem>>, %arg18: memref<1x1xf32, #tpu.memory_space<vmem>>, %arg19: memref<1x1xf32, #tpu.memory_space<vmem>>) attributes {dimension_semantics = [#tpu.dimension_semantics<parallel>, #tpu.dimension_semantics<arbitrary>], iteration_bounds = array<i64: 2, 1>, scalar_prefetch = 0 : i64, scratch_operands = 3 : i64, tpu.core_type = #tpu.core_type<tc>, window_params = [{transform_indices = @transform_0, window_bounds = array<i64: 8, 12>}, {pipeline_mode = #tpu.pipeline_mode<synchronous>, transform_indices = @transform_1, window_bounds = array<i64: 12, 128>}, {pipeline_mode = #tpu.pipeline_mode<synchronous>, transform_indices = @transform_2, window_bounds = array<i64: 1, 128>}, {pipeline_mode = #tpu.pipeline_mode<synchronous>, transform_indices = @transform_3, window_bounds = array<i64: 128, 64>}, {pipeline_mode = #tpu.pipeline_mode<synchronous>, transform_indices = @transform_4, window_bounds = array<i64: 64, 32>}, {pipeline_mode = #tpu.pipeline_mode<synchronous>, transform_indices = @transform_5, window_bounds = array<i64: 32, 16>}, {pipeline_mode = #tpu.pipeline_mode<synchronous>, transform_indices = @transform_6, window_bounds = array<i64: 1, 64>}, {pipeline_mode = #tpu.pipeline_mode<synchronous>, transform_indices = @transform_7, window_bounds = array<i64: 1, 32>}, {pipeline_mode = #tpu.pipeline_mode<synchronous>, transform_indices = @transform_8, window_bounds = array<i64: 1, 16>}, {pipeline_mode = #tpu.pipeline_mode<synchronous>, transform_indices = @transform_9, window_bounds = array<i64: 1, 16>}, {pipeline_mode = #tpu.pipeline_mode<synchronous>, transform_indices = @transform_10, window_bounds = array<i64: 1, 16>}, {pipeline_mode = #tpu.pipeline_mode<synchronous>, transform_indices = @transform_11, window_bounds = array<i64: 1, 1>}, {transform_indices = @transform_12, window_bounds = array<i64: 8, 128>}, {transform_indices = @transform_13, window_bounds = array<i64: 8, 128>}, {transform_indices = @transform_14, window_bounds = array<i64: 8, 128>}]} {
    %c0_i32 = arith.constant 0 : i32
    %0 = arith.cmpi eq, %arg1, %c0_i32 : i32
    %1 = arith.extui %0 : i1 to i32
    %c0_i32_0 = arith.constant 0 : i32
    %2 = arith.cmpi ne, %1, %c0_i32_0 : i32
    scf.if %2 {
      %cst_68 = arith.constant 0.000000e+00 : f32
      %133 = vector.broadcast %cst_68 : f32 to vector<1x1xf32>
      %c0_69 = arith.constant 0 : index
      %c0_70 = arith.constant 0 : index
      %134 = vector.load %arg17[%c0_69, %c0_70] : memref<1x1xf32, #tpu.memory_space<vmem>>, vector<1x1xf32>
      tpu.vector_store %arg17[%c0_69, %c0_70], %133 {strides = array<i32>} : memref<1x1xf32, #tpu.memory_space<vmem>>, vector<1x1xf32>,
      %cst_71 = arith.constant -1.000000e+30 : f32
      %135 = vector.broadcast %cst_71 : f32 to vector<1x1xf32>
      %c0_72 = arith.constant 0 : index
      %c0_73 = arith.constant 0 : index
      %136 = vector.load %arg18[%c0_72, %c0_73] : memref<1x1xf32, #tpu.memory_space<vmem>>, vector<1x1xf32>
      tpu.vector_store %arg18[%c0_72, %c0_73], %135 {strides = array<i32>} : memref<1x1xf32, #tpu.memory_space<vmem>>, vector<1x1xf32>,
      %cst_74 = arith.constant 0.000000e+00 : f32
      %137 = vector.broadcast %cst_74 : f32 to vector<1x1xf32>
      %c0_75 = arith.constant 0 : index
      %c0_76 = arith.constant 0 : index
      %138 = vector.load %arg19[%c0_75, %c0_76] : memref<1x1xf32, #tpu.memory_space<vmem>>, vector<1x1xf32>
      tpu.vector_store %arg19[%c0_75, %c0_76], %137 {strides = array<i32>} : memref<1x1xf32, #tpu.memory_space<vmem>>, vector<1x1xf32>,
    } else {
    }
    %c0 = arith.constant 0 : index
    %c0_1 = arith.constant 0 : index
    %3 = vector.load %arg3[%c0, %c0_1] : memref<12x128xf32, #tpu.memory_space<vmem>>, vector<12x128xf32>
    %c0_2 = arith.constant 0 : index
    %c0_3 = arith.constant 0 : index
    %4 = vector.load %arg2[%c0_2, %c0_3] : memref<8x12xf32, #tpu.memory_space<vmem>>, vector<8x12xf32>
    %cst = arith.constant dense<0.000000e+00> : vector<8x128xf32>
    %5 = tpu.matmul %4, %3, %cst {dimension_numbers = #tpu.dot_dimension_numbers<[1], [0], [0], [1], [0, 0, 1, 1], [], []>} : vector<8x12xf32>, vector<12x128xf32>, vector<8x128xf32> -> vector<8x128xf32>
    %c0_4 = arith.constant 0 : index
    %c0_5 = arith.constant 0 : index
    %6 = vector.load %arg4[%c0_4, %c0_5] : memref<1x128xf32, #tpu.memory_space<vmem>>, vector<1x128xf32>
    %7 = vector.broadcast %6 : vector<1x128xf32> to vector<8x128xf32>
    %8 = arith.addf %5, %7 : vector<8x128xf32>
    %9 = arith.mulf %8, %8 : vector<8x128xf32>
    %10 = arith.mulf %8, %9 : vector<8x128xf32>
    %cst_6 = arith.constant 4.471500e-02 : f32
    %11 = vector.broadcast %cst_6 : f32 to vector<8x128xf32>
    %12 = arith.mulf %11, %10 : vector<8x128xf32>
    %13 = arith.addf %8, %12 : vector<8x128xf32>
    %cst_7 = arith.constant 0.797884583 : f32
    %14 = vector.broadcast %cst_7 : f32 to vector<8x128xf32>
    %15 = arith.mulf %14, %13 : vector<8x128xf32>
    %16 = math.tanh %15 : vector<8x128xf32>
    %cst_8 = arith.constant 1.000000e+00 : f32
    %17 = vector.broadcast %cst_8 : f32 to vector<8x128xf32>
    %18 = arith.addf %17, %16 : vector<8x128xf32>
    %cst_9 = arith.constant 5.000000e-01 : f32
    %19 = vector.broadcast %cst_9 : f32 to vector<8x128xf32>
    %20 = arith.mulf %19, %18 : vector<8x128xf32>
    %21 = arith.mulf %8, %20 : vector<8x128xf32>
    %c0_10 = arith.constant 0 : index
    %c0_11 = arith.constant 0 : index
    %22 = vector.load %arg5[%c0_10, %c0_11] : memref<128x64xf32, #tpu.memory_space<vmem>>, vector<128x64xf32>
    %cst_12 = arith.constant dense<0.000000e+00> : vector<8x64xf32>
    %23 = tpu.matmul %21, %22, %cst_12 {dimension_numbers = #tpu.dot_dimension_numbers<[1], [0], [0], [1], [0, 0, 1, 1], [], []>} : vector<8x128xf32>, vector<128x64xf32>, vector<8x64xf32> -> vector<8x64xf32>
    %c0_13 = arith.constant 0 : index
    %c0_14 = arith.constant 0 : index
    %24 = vector.load %arg8[%c0_13, %c0_14] : memref<1x64xf32, #tpu.memory_space<vmem>>, vector<1x64xf32>
    %25 = vector.broadcast %24 : vector<1x64xf32> to vector<8x64xf32>
    %26 = arith.addf %23, %25 : vector<8x64xf32>
    %27 = arith.mulf %26, %26 : vector<8x64xf32>
    %28 = arith.mulf %26, %27 : vector<8x64xf32>
    %cst_15 = arith.constant 4.471500e-02 : f32
    %29 = vector.broadcast %cst_15 : f32 to vector<8x64xf32>
    %30 = arith.mulf %29, %28 : vector<8x64xf32>
    %31 = arith.addf %26, %30 : vector<8x64xf32>
    %cst_16 = arith.constant 0.797884583 : f32
    %32 = vector.broadcast %cst_16 : f32 to vector<8x64xf32>
    %33 = arith.mulf %32, %31 : vector<8x64xf32>
    %34 = math.tanh %33 : vector<8x64xf32>
    %cst_17 = arith.constant 1.000000e+00 : f32
    %35 = vector.broadcast %cst_17 : f32 to vector<8x64xf32>
    %36 = arith.addf %35, %34 : vector<8x64xf32>
    %cst_18 = arith.constant 5.000000e-01 : f32
    %37 = vector.broadcast %cst_18 : f32 to vector<8x64xf32>
    %38 = arith.mulf %37, %36 : vector<8x64xf32>
    %39 = arith.mulf %26, %38 : vector<8x64xf32>
    %c0_19 = arith.constant 0 : index
    %c0_20 = arith.constant 0 : index
    %40 = vector.load %arg6[%c0_19, %c0_20] : memref<64x32xf32, #tpu.memory_space<vmem>>, vector<64x32xf32>
    %cst_21 = arith.constant dense<0.000000e+00> : vector<8x32xf32>
    %41 = tpu.matmul %39, %40, %cst_21 {dimension_numbers = #tpu.dot_dimension_numbers<[1], [0], [0], [1], [0, 0, 1, 1], [], []>} : vector<8x64xf32>, vector<64x32xf32>, vector<8x32xf32> -> vector<8x32xf32>
    %c0_22 = arith.constant 0 : index
    %c0_23 = arith.constant 0 : index
    %42 = vector.load %arg9[%c0_22, %c0_23] : memref<1x32xf32, #tpu.memory_space<vmem>>, vector<1x32xf32>
    %43 = vector.broadcast %42 : vector<1x32xf32> to vector<8x32xf32>
    %44 = arith.addf %41, %43 : vector<8x32xf32>
    %45 = arith.mulf %44, %44 : vector<8x32xf32>
    %46 = arith.mulf %44, %45 : vector<8x32xf32>
    %cst_24 = arith.constant 4.471500e-02 : f32
    %47 = vector.broadcast %cst_24 : f32 to vector<8x32xf32>
    %48 = arith.mulf %47, %46 : vector<8x32xf32>
    %49 = arith.addf %44, %48 : vector<8x32xf32>
    %cst_25 = arith.constant 0.797884583 : f32
    %50 = vector.broadcast %cst_25 : f32 to vector<8x32xf32>
    %51 = arith.mulf %50, %49 : vector<8x32xf32>
    %52 = math.tanh %51 : vector<8x32xf32>
    %cst_26 = arith.constant 1.000000e+00 : f32
    %53 = vector.broadcast %cst_26 : f32 to vector<8x32xf32>
    %54 = arith.addf %53, %52 : vector<8x32xf32>
    %cst_27 = arith.constant 5.000000e-01 : f32
    %55 = vector.broadcast %cst_27 : f32 to vector<8x32xf32>
    %56 = arith.mulf %55, %54 : vector<8x32xf32>
    %57 = arith.mulf %44, %56 : vector<8x32xf32>
    %c0_28 = arith.constant 0 : index
    %c0_29 = arith.constant 0 : index
    %58 = vector.load %arg7[%c0_28, %c0_29] : memref<32x16xf32, #tpu.memory_space<vmem>>, vector<32x16xf32>
    %cst_30 = arith.constant dense<0.000000e+00> : vector<8x16xf32>
    %59 = tpu.matmul %57, %58, %cst_30 {dimension_numbers = #tpu.dot_dimension_numbers<[1], [0], [0], [1], [0, 0, 1, 1], [], []>} : vector<8x32xf32>, vector<32x16xf32>, vector<8x16xf32> -> vector<8x16xf32>
    %c0_31 = arith.constant 0 : index
    %c0_32 = arith.constant 0 : index
    %60 = vector.load %arg10[%c0_31, %c0_32] : memref<1x16xf32, #tpu.memory_space<vmem>>, vector<1x16xf32>
    %61 = vector.broadcast %60 : vector<1x16xf32> to vector<8x16xf32>
    %62 = arith.addf %59, %61 : vector<8x16xf32>
    %63 = arith.mulf %62, %62 : vector<8x16xf32>
    %64 = arith.mulf %62, %63 : vector<8x16xf32>
    %cst_33 = arith.constant 4.471500e-02 : f32
    %65 = vector.broadcast %cst_33 : f32 to vector<8x16xf32>
    %66 = arith.mulf %65, %64 : vector<8x16xf32>
    %67 = arith.addf %62, %66 : vector<8x16xf32>
    %cst_34 = arith.constant 0.797884583 : f32
    %68 = vector.broadcast %cst_34 : f32 to vector<8x16xf32>
    %69 = arith.mulf %68, %67 : vector<8x16xf32>
    %70 = math.tanh %69 : vector<8x16xf32>
    %cst_35 = arith.constant 1.000000e+00 : f32
    %71 = vector.broadcast %cst_35 : f32 to vector<8x16xf32>
    %72 = arith.addf %71, %70 : vector<8x16xf32>
    %cst_36 = arith.constant 5.000000e-01 : f32
    %73 = vector.broadcast %cst_36 : f32 to vector<8x16xf32>
    %74 = arith.mulf %73, %72 : vector<8x16xf32>
    %75 = arith.mulf %62, %74 : vector<8x16xf32>
    %c1_i32 = arith.constant 1 : i32
    %76 = arith.muli %arg0, %c1_i32 : i32
    %77 = arith.addi %76, %arg1 : i32
    %c8_i32 = arith.constant 8 : i32
    %78 = arith.muli %77, %c8_i32 : i32
    %79 = tpu.iota {dimensions = array<i32: 0>} : vector<8x1xi32>
    %80 = vector.broadcast %78 : i32 to vector<8x1xi32>
    %81 = arith.addi %80, %79 : vector<8x1xi32>
    %c8_i32_37 = arith.constant 8 : i32
    %82 = vector.broadcast %c8_i32_37 : i32 to vector<8x1xi32>
    %83 = arith.cmpi slt, %81, %82 : vector<8x1xi32>
    %cst_38 = arith.constant 0.000000e+00 : f32
    %84 = vector.shape_cast %83 : vector<8x1xi1> to vector<8x1xi1>
    %85 = vector.broadcast %84 : vector<8x1xi1> to vector<8x16xi1>
    %86 = vector.broadcast %cst_38 : f32 to vector<8x16xf32>
    %87 = arith.select %85, %75, %86 : vector<8x16xi1>, vector<8x16xf32>
    %cst_39 = arith.constant dense<0.000000e+00> : vector<16xf32>
    %88 = vector.multi_reduction <add>, %87, %cst_39 [0] : vector<8x16xf32> to vector<16xf32>
    %89 = vector.shape_cast %88 : vector<16xf32> to vector<1x16xf32>
    %90 = arith.extui %83 : vector<8x1xi1> to vector<8x1xi32>
    %91 = arith.sitofp %90 : vector<8x1xi32> to vector<8x1xf32>
    %cst_40 = arith.constant dense<0.000000e+00> : vector<1xf32>
    %92 = vector.multi_reduction <add>, %91, %cst_40 [0] : vector<8x1xf32> to vector<1xf32>
    %93 = vector.shape_cast %92 : vector<1xf32> to vector<1x1xf32>
    %c0_41 = arith.constant 0 : index
    %c0_42 = arith.constant 0 : index
    %94 = vector.load %arg17[%c0_41, %c0_42] : memref<1x1xf32, #tpu.memory_space<vmem>>, vector<1x1xf32>
    %c0_43 = arith.constant 0 : index
    %c0_44 = arith.constant 0 : index
    %95 = vector.load %arg11[%c0_43, %c0_44] : memref<1x16xf32, #tpu.memory_space<vmem>>, vector<1x16xf32>
    %96 = arith.mulf %89, %95 : vector<1x16xf32>
    %cst_45 = arith.constant dense<0.000000e+00> : vector<1xf32>
    %97 = vector.multi_reduction <add>, %96, %cst_45 [1] : vector<1x16xf32> to vector<1xf32>
    %98 = vector.shape_cast %97 : vector<1xf32> to vector<1x1xf32>
    %c0_46 = arith.constant 0 : index
    %c0_47 = arith.constant 0 : index
    %99 = vector.load %arg13[%c0_46, %c0_47] : memref<1x1xf32, #tpu.memory_space<vmem>>, vector<1x1xf32>
    %100 = arith.mulf %93, %99 : vector<1x1xf32>
    %101 = arith.addf %98, %100 : vector<1x1xf32>
    %102 = arith.addf %94, %101 : vector<1x1xf32>
    %c0_48 = arith.constant 0 : index
    %c0_49 = arith.constant 0 : index
    %103 = vector.load %arg17[%c0_48, %c0_49] : memref<1x1xf32, #tpu.memory_space<vmem>>, vector<1x1xf32>
    tpu.vector_store %arg17[%c0_48, %c0_49], %102 {strides = array<i32>} : memref<1x1xf32, #tpu.memory_space<vmem>>, vector<1x1xf32>,
    %c0_50 = arith.constant 0 : index
    %c0_51 = arith.constant 0 : index
    %104 = vector.load %arg12[%c0_50, %c0_51] : memref<1x16xf32, #tpu.memory_space<vmem>>, vector<1x16xf32>
    %105 = vector.broadcast %104 : vector<1x16xf32> to vector<8x16xf32>
    %106 = arith.mulf %75, %105 : vector<8x16xf32>
    %cst_52 = arith.constant dense<0.000000e+00> : vector<8xf32>
    %107 = vector.multi_reduction <add>, %106, %cst_52 [1] : vector<8x16xf32> to vector<8xf32>
    %108 = vector.shape_cast %107 : vector<8xf32> to vector<8x1xf32>
    %c0_53 = arith.constant 0 : index
    %c0_54 = arith.constant 0 : index
    %109 = vector.load %arg13[%c0_53, %c0_54] : memref<1x1xf32, #tpu.memory_space<vmem>>, vector<1x1xf32>
    %110 = vector.broadcast %109 : vector<1x1xf32> to vector<8x1xf32>
    %111 = arith.addf %108, %110 : vector<8x1xf32>
    %cst_55 = arith.constant -1.000000e+30 : f32
    %112 = vector.broadcast %cst_55 : f32 to vector<8x1xf32>
    %113 = arith.select %83, %111, %112 : vector<8x1xi1>, vector<8x1xf32>
    %cst_56 = arith.constant dense<0xFF800000> : vector<1xf32>
    %114 = vector.multi_reduction <maximumf>, %113, %cst_56 [0] : vector<8x1xf32> to vector<1xf32>
    %115 = vector.shape_cast %114 : vector<1xf32> to vector<1x1xf32>
    %c0_57 = arith.constant 0 : index
    %c0_58 = arith.constant 0 : index
    %116 = vector.load %arg18[%c0_57, %c0_58] : memref<1x1xf32, #tpu.memory_space<vmem>>, vector<1x1xf32>
    %117 = arith.maximumf %116, %115 : vector<1x1xf32>
    %c0_59 = arith.constant 0 : index
    %c0_60 = arith.constant 0 : index
    %118 = vector.load %arg19[%c0_59, %c0_60] : memref<1x1xf32, #tpu.memory_space<vmem>>, vector<1x1xf32>
    %119 = arith.subf %116, %117 : vector<1x1xf32>
    %120 = math.exp %119 : vector<1x1xf32>
    %121 = arith.mulf %118, %120 : vector<1x1xf32>
    %122 = vector.broadcast %117 : vector<1x1xf32> to vector<8x1xf32>
    %123 = arith.subf %113, %122 : vector<8x1xf32>
    %124 = math.exp %123 : vector<8x1xf32>
    %cst_61 = arith.constant dense<0.000000e+00> : vector<1xf32>
    %125 = vector.multi_reduction <add>, %124, %cst_61 [0] : vector<8x1xf32> to vector<1xf32>
    %126 = vector.shape_cast %125 : vector<1xf32> to vector<1x1xf32>
    %127 = arith.addf %121, %126 : vector<1x1xf32>
    %c0_62 = arith.constant 0 : index
    %c0_63 = arith.constant 0 : index
    %128 = vector.load %arg19[%c0_62, %c0_63] : memref<1x1xf32, #tpu.memory_space<vmem>>, vector<1x1xf32>
    tpu.vector_store %arg19[%c0_62, %c0_63], %127 {strides = array<i32>} : memref<1x1xf32, #tpu.memory_space<vmem>>, vector<1x1xf32>,
    %c0_64 = arith.constant 0 : index
    %c0_65 = arith.constant 0 : index
    %129 = vector.load %arg18[%c0_64, %c0_65] : memref<1x1xf32, #tpu.memory_space<vmem>>, vector<1x1xf32>
    tpu.vector_store %arg18[%c0_64, %c0_65], %117 {strides = array<i32>} : memref<1x1xf32, #tpu.memory_space<vmem>>, vector<1x1xf32>,
    %c0_i32_66 = arith.constant 0 : i32
    %130 = arith.cmpi eq, %arg1, %c0_i32_66 : i32
    %131 = arith.extui %130 : i1 to i32
    %c0_i32_67 = arith.constant 0 : i32
    %132 = arith.cmpi ne, %131, %c0_i32_67 : i32
    scf.if %132 {
      %c0_68 = arith.constant 0 : index
      %c0_69 = arith.constant 0 : index
      %133 = vector.load %arg17[%c0_68, %c0_69] : memref<1x1xf32, #tpu.memory_space<vmem>>, vector<1x1xf32>
      %134 = vector.shape_cast %133 : vector<1x1xf32> to vector<1x1xf32>
      %135 = vector.broadcast %134 : vector<1x1xf32> to vector<8x128xf32>
      %c0_70 = arith.constant 0 : index
      %c0_71 = arith.constant 0 : index
      %136 = vector.load %arg14[%c0_70, %c0_71] : memref<8x128xf32, #tpu.memory_space<vmem>>, vector<8x128xf32>
      tpu.vector_store %arg14[%c0_70, %c0_71], %135 {strides = array<i32>} : memref<8x128xf32, #tpu.memory_space<vmem>>, vector<8x128xf32>,
      %c0_72 = arith.constant 0 : index
      %c0_73 = arith.constant 0 : index
      %137 = vector.load %arg18[%c0_72, %c0_73] : memref<1x1xf32, #tpu.memory_space<vmem>>, vector<1x1xf32>
      %138 = vector.shape_cast %137 : vector<1x1xf32> to vector<1x1xf32>
      %139 = vector.broadcast %138 : vector<1x1xf32> to vector<8x128xf32>
      %c0_74 = arith.constant 0 : index
      %c0_75 = arith.constant 0 : index
      %140 = vector.load %arg15[%c0_74, %c0_75] : memref<8x128xf32, #tpu.memory_space<vmem>>, vector<8x128xf32>
      tpu.vector_store %arg15[%c0_74, %c0_75], %139 {strides = array<i32>} : memref<8x128xf32, #tpu.memory_space<vmem>>, vector<8x128xf32>,
      %c0_76 = arith.constant 0 : index
      %c0_77 = arith.constant 0 : index
      %141 = vector.load %arg19[%c0_76, %c0_77] : memref<1x1xf32, #tpu.memory_space<vmem>>, vector<1x1xf32>
      %142 = vector.shape_cast %141 : vector<1x1xf32> to vector<1x1xf32>
      %143 = vector.broadcast %142 : vector<1x1xf32> to vector<8x128xf32>
      %c0_78 = arith.constant 0 : index
      %c0_79 = arith.constant 0 : index
      %144 = vector.load %arg16[%c0_78, %c0_79] : memref<8x128xf32, #tpu.memory_space<vmem>>, vector<8x128xf32>
      tpu.vector_store %arg16[%c0_78, %c0_79], %143 {strides = array<i32>} : memref<8x128xf32, #tpu.memory_space<vmem>>, vector<8x128xf32>,
    } else {
    }
    return
  }
  func.func @transform_0(%arg0: i32, %arg1: i32) -> (i32, i32) {
    %c1_i32 = arith.constant 1 : i32
    %0 = arith.muli %arg0, %c1_i32 : i32
    %1 = arith.addi %0, %arg1 : i32
    %c0_i32 = arith.constant 0 : i32
    %c0_i32_0 = arith.constant 0 : i32
    return %1, %c0_i32 : i32, i32
  }
  func.func @transform_1(%arg0: i32, %arg1: i32) -> (i32, i32) {
    %c0_i32 = arith.constant 0 : i32
    %c0_i32_0 = arith.constant 0 : i32
    %c0_i32_1 = arith.constant 0 : i32
    return %c0_i32, %c0_i32_0 : i32, i32
  }
  func.func @transform_2(%arg0: i32, %arg1: i32) -> (i32, i32) {
    %c0_i32 = arith.constant 0 : i32
    %c0_i32_0 = arith.constant 0 : i32
    %c0_i32_1 = arith.constant 0 : i32
    return %c0_i32, %c0_i32_0 : i32, i32
  }
  func.func @transform_3(%arg0: i32, %arg1: i32) -> (i32, i32) {
    %c0_i32 = arith.constant 0 : i32
    %c0_i32_0 = arith.constant 0 : i32
    %c0_i32_1 = arith.constant 0 : i32
    return %c0_i32, %c0_i32_0 : i32, i32
  }
  func.func @transform_4(%arg0: i32, %arg1: i32) -> (i32, i32) {
    %c0_i32 = arith.constant 0 : i32
    %c0_i32_0 = arith.constant 0 : i32
    %c0_i32_1 = arith.constant 0 : i32
    return %c0_i32, %c0_i32_0 : i32, i32
  }
  func.func @transform_5(%arg0: i32, %arg1: i32) -> (i32, i32) {
    %c0_i32 = arith.constant 0 : i32
    %c0_i32_0 = arith.constant 0 : i32
    %c0_i32_1 = arith.constant 0 : i32
    return %c0_i32, %c0_i32_0 : i32, i32
  }
  func.func @transform_6(%arg0: i32, %arg1: i32) -> (i32, i32) {
    %c0_i32 = arith.constant 0 : i32
    %c0_i32_0 = arith.constant 0 : i32
    %c0_i32_1 = arith.constant 0 : i32
    return %c0_i32, %c0_i32_0 : i32, i32
  }
  func.func @transform_7(%arg0: i32, %arg1: i32) -> (i32, i32) {
    %c0_i32 = arith.constant 0 : i32
    %c0_i32_0 = arith.constant 0 : i32
    %c0_i32_1 = arith.constant 0 : i32
    return %c0_i32, %c0_i32_0 : i32, i32
  }
  func.func @transform_8(%arg0: i32, %arg1: i32) -> (i32, i32) {
    %c0_i32 = arith.constant 0 : i32
    %c0_i32_0 = arith.constant 0 : i32
    %c0_i32_1 = arith.constant 0 : i32
    return %c0_i32, %c0_i32_0 : i32, i32
  }
  func.func @transform_9(%arg0: i32, %arg1: i32) -> (i32, i32) {
    %c0_i32 = arith.constant 0 : i32
    %c0_i32_0 = arith.constant 0 : i32
    %c0_i32_1 = arith.constant 0 : i32
    return %c0_i32, %c0_i32_0 : i32, i32
  }
  func.func @transform_10(%arg0: i32, %arg1: i32) -> (i32, i32) {
    %c0_i32 = arith.constant 0 : i32
    %c0_i32_0 = arith.constant 0 : i32
    %c0_i32_1 = arith.constant 0 : i32
    return %c0_i32, %c0_i32_0 : i32, i32
  }
  func.func @transform_11(%arg0: i32, %arg1: i32) -> (i32, i32) {
    %c0_i32 = arith.constant 0 : i32
    %c0_i32_0 = arith.constant 0 : i32
    %c0_i32_1 = arith.constant 0 : i32
    return %c0_i32, %c0_i32_0 : i32, i32
  }
  func.func @transform_12(%arg0: i32, %arg1: i32) -> (i32, i32) {
    %c0_i32 = arith.constant 0 : i32
    %c0_i32_0 = arith.constant 0 : i32
    return %arg0, %c0_i32 : i32, i32
  }
  func.func @transform_13(%arg0: i32, %arg1: i32) -> (i32, i32) {
    %c0_i32 = arith.constant 0 : i32
    %c0_i32_0 = arith.constant 0 : i32
    return %arg0, %c0_i32 : i32, i32
  }
  func.func @transform_14(%arg0: i32, %arg1: i32) -> (i32, i32) {
    %c0_i32 = arith.constant 0 : i32
    %c0_i32_0 = arith.constant 0 : i32
    return %arg0, %c0_i32 : i32, i32
  }
}

</mosaic_0001>

<llo_original>
// kernel: mine_forward.1
$region0: #{mine_forward.1}
  #allocation0 [shape = 'u32[]', space=smem, size = 0x4, offset = 0x4, fixed_abs, tag = 'smem constant byte address 0x4 - core index']
  #allocation1 [shape = 'u32[144,128]{1,0:T(1,128)}', space=vmem, size = 0x12000, scoped, tag = 'internal scratch']
  #allocation2 [shape = 'f32[1,1]{1,0:T(1,128)}', space=vmem, size = 0x200, scoped, tag = 'scratch operand']
  #allocation3 [shape = 'f32[1,1]{1,0:T(1,128)}', space=vmem, size = 0x200, scoped, tag = 'scratch operand']
  #allocation4 [shape = 'f32[1,1]{1,0:T(1,128)}', space=vmem, size = 0x200, scoped, tag = 'scratch operand']
  #allocation5 [shape = 'f32[1,1]{1,0:T(1,128)S(1)}', space=vmem, size = 0x200, scoped, tag = 'scoped memory for mine_forward.1']
  %s0 = inlined_call_operand.vmem [shape: f32[16,12], index: 0, kind: input, shape index: {}]
  %s1 = inlined_call_operand.vmem [shape: f32[12,128], index: 1, kind: input, shape index: {}]
  %s2 = inlined_call_operand.vmem [shape: f32[1,128], index: 2, kind: input, shape index: {}]
  %s3 = inlined_call_operand.vmem [shape: f32[128,64], index: 3, kind: input, shape index: {}]
  %s4 = inlined_call_operand.vmem [shape: f32[64,32], index: 4, kind: input, shape index: {}]
  %s5 = inlined_call_operand.vmem [shape: f32[32,16], index: 5, kind: input, shape index: {}]
  %s6 = inlined_call_operand.vmem [shape: f32[1,64], index: 6, kind: input, shape index: {}]
  %s7 = inlined_call_operand.vmem [shape: f32[1,32], index: 7, kind: input, shape index: {}]
  %s8 = inlined_call_operand.vmem [shape: f32[1,16], index: 8, kind: input, shape index: {}]
  %s9 = inlined_call_operand.vmem [shape: f32[1,16], index: 9, kind: input, shape index: {}]
  %s10 = inlined_call_operand.vmem [shape: f32[1,16], index: 10, kind: input, shape index: {}]
  %s11 = inlined_call_operand.<no memory space> [shape: f32[1,1], index: 11, kind: input, shape index: {}]
  %s12 = inlined_call_operand.vmem [shape: f32[16,128], index: 12, kind: output, shape index: {0}]
  %s13 = inlined_call_operand.vmem [shape: f32[16,128], index: 13, kind: output, shape index: {1}]
  %s14 = inlined_call_operand.vmem [shape: f32[16,128], index: 14, kind: output, shape index: {2}]
  %15 = xla_tuple %s12, %s13, %s14
  %s16 = sld [smem:[#allocation0]]
  $region105: #{mine_forward.1} parent=0
    _
  %s18 = ssub.s32 1, %s16
  %s19 = scalar_select 0, %s18, %s16
  %v20 = vstv %s11
  %21 = vst [vmem:[#allocation5] sm:$0x1] %v20
  loop: start=0, step=1, limit=4
  $region2: #{mine_forward.1} parent=0 // loop_pre_header
    _
  $region3: #{mine_forward.1} parent=0 // loop_header
    %s23 = sphi 0, %s27
    %p24 = scmp.ge.s32.totalorder %s23, 4
    %s30 = sphi 0, %s42
    %s31 = sphi 0, %s38
    %s32 = sphi 0, %s30
    %s33 = sphi 0, %s31
    %s34 = sphi 0, %s32
    %s35 = sphi 0, %s33
    %s47 = sphi 0, %s49
    %s50 = sphi 0, %s47
    %s51 = sphi 0, %s50
    %s67 = sphi 0, %s51
    %s71 = sphi 0, %s71
    %s73 = sphi 0, %s71
    %s74 = sphi 0, %s73
    %s88 = sphi 0, %s74
    %s92 = sphi 0, %s92
    %s94 = sphi 0, %s92
    %s95 = sphi 0, %s94
    %s109 = sphi 0, %s95
    %s113 = sphi 0, %s113
    %s115 = sphi 0, %s113
    %s116 = sphi 0, %s115
    %s130 = sphi 0, %s116
    %s134 = sphi 0, %s134
    %s136 = sphi 0, %s134
    %s137 = sphi 0, %s136
    %s151 = sphi 0, %s137
    %s155 = sphi 0, %s155
    %s157 = sphi 0, %s155
    %s158 = sphi 0, %s157
    %s172 = sphi 0, %s158
    %s176 = sphi 0, %s176
    %s178 = sphi 0, %s176
    %s179 = sphi 0, %s178
    %s193 = sphi 0, %s179
    %s197 = sphi 0, %s197
    %s199 = sphi 0, %s197
    %s200 = sphi 0, %s199
    %s214 = sphi 0, %s200
    %s218 = sphi 0, %s218
    %s220 = sphi 0, %s218
    %s221 = sphi 0, %s220
    %s235 = sphi 0, %s221
    %s239 = sphi 0, %s239
    %s241 = sphi 0, %s239
    %s242 = sphi 0, %s241
    %s256 = sphi 0, %s242
    %s260 = sphi 0, %s260
    %s262 = sphi 0, %s260
    %s263 = sphi 0, %s262
    %s277 = sphi 0, %s263
    %s281 = sphi 0, %s281
    %s283 = sphi 0, %s281
    %s284 = sphi 0, %s283
    %s298 = sphi 0, %s284
    %s304 = sphi 0, %s306
    %s307 = sphi 0, %s304
    %s308 = sphi 0, %s307
    %s324 = sphi 0, %s308
    %s330 = sphi 0, %s332
    %s333 = sphi 0, %s330
    %s334 = sphi 0, %s333
    %s350 = sphi 0, %s334
    %s356 = sphi 0, %s358
    %s359 = sphi 0, %s356
    %s360 = sphi 0, %s359
    %s376 = sphi 0, %s360
  $region4: #{mine_forward.1} parent=0 // loop_header_branch
    %26 = sbr.rel (%p24) target = $region8
  $region5: #{mine_forward.1} parent=0 // loop_body
    %s28 = ssub.s32 %s23, 1
    %s29 = ssub.s32 %s23, 2
    %s36 = sadd.s32 1, %s31
    %p37 = scmp.ge.s32.totalorder %s36, 1
    %s38 = scalar_select %p37, 0, %s36
    %s39 = sadd.s32 1, %s30
    %s40 = scalar_select %p37, %s39, %s30
    %p41 = scmp.ge.s32.totalorder %s40, 2
    %s42 = scalar_select %p41, 0, %s40
    %s43 = sadd.s32 %s30, %s31
    %s44 = sadd.s32 %s42, %s38
    %s45 = ssub.s32 %s43, %s44
    %p46 = scmp.eq.s32.totalorder %s45, 0
    %s48 = sadd.s32 %s47, 1
    %s49 = scalar_select %p46, %s47, %s48
    %p52 = pneg %p46
    %p53 = scmp.eq.s32.totalorder %s23, 1
    %p54 = por %p52, %p53
    %p55 = scmp.ne.s32.totalorder %s47, %s50
    %p56 = scmp.eq.s32.totalorder %s23, 0
    %p57 = por %p55, %p56
    %p58 = scmp.ne.s32.totalorder %s47, %s50
    %p59 = scmp.eq.s32.totalorder %s28, 1
    %p60 = por %p58, %p59
    %p61 = scmp.ne.s32.totalorder %s50, %s51
    %p62 = scmp.eq.s32.totalorder %s28, 0
    %p63 = por %p61, %p62
    %p64 = scmp.ne.s32.totalorder %s50, %s51
    %p65 = scmp.eq.s32.totalorder %s29, 1
    %p66 = por %p64, %p65
    %p68 = scmp.ne.s32.totalorder %s51, %s67
    %p69 = scmp.eq.s32.totalorder %s29, 0
    %p70 = por %p68, %p69
    %s72 = sadd.s32 %s71, 1
    %p75 = scmp.eq.s32.totalorder %s23, 1
    %p76 = scmp.ne.s32.totalorder %s71, %s73
    %p77 = scmp.eq.s32.totalorder %s23, 0
    %p78 = por %p76, %p77
    %p79 = scmp.ne.s32.totalorder %s71, %s73
    %p80 = scmp.eq.s32.totalorder %s28, 1
    %p81 = por %p79, %p80
    %p82 = scmp.ne.s32.totalorder %s73, %s74
    %p83 = scmp.eq.s32.totalorder %s28, 0
    %p84 = por %p82, %p83
    %p85 = scmp.ne.s32.totalorder %s73, %s74
    %p86 = scmp.eq.s32.totalorder %s29, 1
    %p87 = por %p85, %p86
    %p89 = scmp.ne.s32.totalorder %s74, %s88
    %p90 = scmp.eq.s32.totalorder %s29, 0
    %p91 = por %p89, %p90
    %s93 = sadd.s32 %s92, 1
    %p96 = scmp.eq.s32.totalorder %s23, 1
    %p97 = scmp.ne.s32.totalorder %s92, %s94
    %p98 = scmp.eq.s32.totalorder %s23, 0
    %p99 = por %p97, %p98
    %p100 = scmp.ne.s32.totalorder %s92, %s94
    %p101 = scmp.eq.s32.totalorder %s28, 1
    %p102 = por %p100, %p101
    %p103 = scmp.ne.s32.totalorder %s94, %s95
    %p104 = scmp.eq.s32.totalorder %s28, 0
    %p105 = por %p103, %p104
    %p106 = scmp.ne.s32.totalorder %s94, %s95
    %p107 = scmp.eq.s32.totalorder %s29, 1
    %p108 = por %p106, %p107
    %p110 = scmp.ne.s32.totalorder %s95, %s109
    %p111 = scmp.eq.s32.totalorder %s29, 0
    %p112 = por %p110, %p111
    %s114 = sadd.s32 %s113, 1
    %p117 = scmp.eq.s32.totalorder %s23, 1
    %p118 = scmp.ne.s32.totalorder %s113, %s115
    %p119 = scmp.eq.s32.totalorder %s23, 0
    %p120 = por %p118, %p119
    %p121 = scmp.ne.s32.totalorder %s113, %s115
    %p122 = scmp.eq.s32.totalorder %s28, 1
    %p123 = por %p121, %p122
    %p124 = scmp.ne.s32.totalorder %s115, %s116
    %p125 = scmp.eq.s32.totalorder %s28, 0
    %p126 = por %p124, %p125
    %p127 = scmp.ne.s32.totalorder %s115, %s116
    %p128 = scmp.eq.s32.totalorder %s29, 1
    %p129 = por %p127, %p128
    %p131 = scmp.ne.s32.totalorder %s116, %s130
    %p132 = scmp.eq.s32.totalorder %s29, 0
    %p133 = por %p131, %p132
    %s135 = sadd.s32 %s134, 1
    %p138 = scmp.eq.s32.totalorder %s23, 1
    %p139 = scmp.ne.s32.totalorder %s134, %s136
    %p140 = scmp.eq.s32.totalorder %s23, 0
    %p141 = por %p139, %p140
    %p142 = scmp.ne.s32.totalorder %s134, %s136
    %p143 = scmp.eq.s32.totalorder %s28, 1
    %p144 = por %p142, %p143
    %p145 = scmp.ne.s32.totalorder %s136, %s137
    %p146 = scmp.eq.s32.totalorder %s28, 0
    %p147 = por %p145, %p146
    %p148 = scmp.ne.s32.totalorder %s136, %s137
    %p149 = scmp.eq.s32.totalorder %s29, 1
    %p150 = por %p148, %p149
    %p152 = scmp.ne.s32.totalorder %s137, %s151
    %p153 = scmp.eq.s32.totalorder %s29, 0
    %p154 = por %p152, %p153
    %s156 = sadd.s32 %s155, 1
    %p159 = scmp.eq.s32.totalorder %s23, 1
    %p160 = scmp.ne.s32.totalorder %s155, %s157
    %p161 = scmp.eq.s32.totalorder %s23, 0
    %p162 = por %p160, %p161
    %p163 = scmp.ne.s32.totalorder %s155, %s157
    %p164 = scmp.eq.s32.totalorder %s28, 1
    %p165 = por %p163, %p164
    %p166 = scmp.ne.s32.totalorder %s157, %s158
    %p167 = scmp.eq.s32.totalorder %s28, 0
    %p168 = por %p166, %p167
    %p169 = scmp.ne.s32.totalorder %s157, %s158
    %p170 = scmp.eq.s32.totalorder %s29, 1
    %p171 = por %p169, %p170
    %p173 = scmp.ne.s32.totalorder %s158, %s172
    %p174 = scmp.eq.s32.totalorder %s29, 0
    %p175 = por %p173, %p174
    %s177 = sadd.s32 %s176, 1
    %p180 = scmp.eq.s32.totalorder %s23, 1
    %p181 = scmp.ne.s32.totalorder %s176, %s178
    %p182 = scmp.eq.s32.totalorder %s23, 0
    %p183 = por %p181, %p182
    %p184 = scmp.ne.s32.totalorder %s176, %s178
    %p185 = scmp.eq.s32.totalorder %s28, 1
    %p186 = por %p184, %p185
    %p187 = scmp.ne.s32.totalorder %s178, %s179
    %p188 = scmp.eq.s32.totalorder %s28, 0
    %p189 = por %p187, %p188
    %p190 = scmp.ne.s32.totalorder %s178, %s179
    %p191 = scmp.eq.s32.totalorder %s29, 1
    %p192 = por %p190, %p191
    %p194 = scmp.ne.s32.totalorder %s179, %s193
    %p195 = scmp.eq.s32.totalorder %s29, 0
    %p196 = por %p194, %p195
    %s198 = sadd.s32 %s197, 1
    %p201 = scmp.eq.s32.totalorder %s23, 1
    %p202 = scmp.ne.s32.totalorder %s197, %s199
    %p203 = scmp.eq.s32.totalorder %s23, 0
    %p204 = por %p202, %p203
    %p205 = scmp.ne.s32.totalorder %s197, %s199
    %p206 = scmp.eq.s32.totalorder %s28, 1
    %p207 = por %p205, %p206
    %p208 = scmp.ne.s32.totalorder %s199, %s200
    %p209 = scmp.eq.s32.totalorder %s28, 0
    %p210 = por %p208, %p209
    %p211 = scmp.ne.s32.totalorder %s199, %s200
    %p212 = scmp.eq.s32.totalorder %s29, 1
    %p213 = por %p211, %p212
    %p215 = scmp.ne.s32.totalorder %s200, %s214
    %p216 = scmp.eq.s32.totalorder %s29, 0
    %p217 = por %p215, %p216
    %s219 = sadd.s32 %s218, 1
    %p222 = scmp.eq.s32.totalorder %s23, 1
    %p223 = scmp.ne.s32.totalorder %s218, %s220
    %p224 = scmp.eq.s32.totalorder %s23, 0
    %p225 = por %p223, %p224
    %p226 = scmp.ne.s32.totalorder %s218, %s220
    %p227 = scmp.eq.s32.totalorder %s28, 1
    %p228 = por %p226, %p227
    %p229 = scmp.ne.s32.totalorder %s220, %s221
    %p230 = scmp.eq.s32.totalorder %s28, 0
    %p231 = por %p229, %p230
    %p232 = scmp.ne.s32.totalorder %s220, %s221
    %p233 = scmp.eq.s32.totalorder %s29, 1
    %p234 = por %p232, %p233
    %p236 = scmp.ne.s32.totalorder %s221, %s235
    %p237 = scmp.eq.s32.totalorder %s29, 0
    %p238 = por %p236, %p237
    %s240 = sadd.s32 %s239, 1
    %p243 = scmp.eq.s32.totalorder %s23, 1
    %p244 = scmp.ne.s32.totalorder %s239, %s241
    %p245 = scmp.eq.s32.totalorder %s23, 0
    %p246 = por %p244, %p245
    %p247 = scmp.ne.s32.totalorder %s239, %s241
    %p248 = scmp.eq.s32.totalorder %s28, 1
    %p249 = por %p247, %p248
    %p250 = scmp.ne.s32.totalorder %s241, %s242
    %p251 = scmp.eq.s32.totalorder %s28, 0
    %p252 = por %p250, %p251
    %p253 = scmp.ne.s32.totalorder %s241, %s242
    %p254 = scmp.eq.s32.totalorder %s29, 1
    %p255 = por %p253, %p254
    %p257 = scmp.ne.s32.totalorder %s242, %s256
    %p258 = scmp.eq.s32.totalorder %s29, 0
    %p259 = por %p257, %p258
    %s261 = sadd.s32 %s260, 1
    %p264 = scmp.eq.s32.totalorder %s23, 1
    %p265 = scmp.ne.s32.totalorder %s260, %s262
    %p266 = scmp.eq.s32.totalorder %s23, 0
    %p267 = por %p265, %p266
    %p268 = scmp.ne.s32.totalorder %s260, %s262
    %p269 = scmp.eq.s32.totalorder %s28, 1
    %p270 = por %p268, %p269
    %p271 = scmp.ne.s32.totalorder %s262, %s263
    %p272 = scmp.eq.s32.totalorder %s28, 0
    %p273 = por %p271, %p272
    %p274 = scmp.ne.s32.totalorder %s262, %s263
    %p275 = scmp.eq.s32.totalorder %s29, 1
    %p276 = por %p274, %p275
    %p278 = scmp.ne.s32.totalorder %s263, %s277
    %p279 = scmp.eq.s32.totalorder %s29, 0
    %p280 = por %p278, %p279
    %s282 = sadd.s32 %s281, 1
    %p285 = scmp.eq.s32.totalorder %s23, 1
    %p286 = scmp.ne.s32.totalorder %s281, %s283
    %p287 = scmp.eq.s32.totalorder %s23, 0
    %p288 = por %p286, %p287
    %p289 = scmp.ne.s32.totalorder %s281, %s283
    %p290 = scmp.eq.s32.totalorder %s28, 1
    %p291 = por %p289, %p290
    %p292 = scmp.ne.s32.totalorder %s283, %s284
    %p293 = scmp.eq.s32.totalorder %s28, 0
    %p294 = por %p292, %p293
    %p295 = scmp.ne.s32.totalorder %s283, %s284
    %p296 = scmp.eq.s32.totalorder %s29, 1
    %p297 = por %p295, %p296
    %p299 = scmp.ne.s32.totalorder %s284, %s298
    %p300 = scmp.eq.s32.totalorder %s29, 0
    %p301 = por %p299, %p300
    %s302 = ssub.s32 %s30, %s42
    %p303 = scmp.eq.s32.totalorder %s302, 0
    %s305 = sadd.s32 %s304, 1
    %s306 = scalar_select %p303, %s304, %s305
    %p309 = pneg %p303
    %p310 = scmp.eq.s32.totalorder %s23, 1
    %p311 = por %p309, %p310
    %p312 = scmp.ne.s32.totalorder %s304, %s307
    %p313 = scmp.eq.s32.totalorder %s23, 0
    %p314 = por %p312, %p313
    %p315 = scmp.ne.s32.totalorder %s304, %s307
    %p316 = scmp.eq.s32.totalorder %s28, 1
    %p317 = por %p315, %p316
    %p318 = scmp.ne.s32.totalorder %s307, %s308
    %p319 = scmp.eq.s32.totalorder %s28, 0
    %p320 = por %p318, %p319
    %p321 = scmp.ne.s32.totalorder %s307, %s308
    %p322 = scmp.eq.s32.totalorder %s29, 1
    %p323 = por %p321, %p322
    %p325 = scmp.ne.s32.totalorder %s308, %s324
    %p326 = scmp.eq.s32.totalorder %s29, 0
    %p327 = por %p325, %p326
    %s328 = ssub.s32 %s30, %s42
    %p329 = scmp.eq.s32.totalorder %s328, 0
    %s331 = sadd.s32 %s330, 1
    %s332 = scalar_select %p329, %s330, %s331
    %p335 = pneg %p329
    %p336 = scmp.eq.s32.totalorder %s23, 1
    %p337 = por %p335, %p336
    %p338 = scmp.ne.s32.totalorder %s330, %s333
    %p339 = scmp.eq.s32.totalorder %s23, 0
    %p340 = por %p338, %p339
    %p341 = scmp.ne.s32.totalorder %s330, %s333
    %p342 = scmp.eq.s32.totalorder %s28, 1
    %p343 = por %p341, %p342
    %p344 = scmp.ne.s32.totalorder %s333, %s334
    %p345 = scmp.eq.s32.totalorder %s28, 0
    %p346 = por %p344, %p345
    %p347 = scmp.ne.s32.totalorder %s333, %s334
    %p348 = scmp.eq.s32.totalorder %s29, 1
    %p349 = por %p347, %p348
    %p351 = scmp.ne.s32.totalorder %s334, %s350
    %p352 = scmp.eq.s32.totalorder %s29, 0
    %p353 = por %p351, %p352
    %s354 = ssub.s32 %s30, %s42
    %p355 = scmp.eq.s32.totalorder %s354, 0
    %s357 = sadd.s32 %s356, 1
    %s358 = scalar_select %p355, %s356, %s357
    %p361 = pneg %p355
    %p362 = scmp.eq.s32.totalorder %s23, 1
    %p363 = por %p361, %p362
    %p364 = scmp.ne.s32.totalorder %s356, %s359
    %p365 = scmp.eq.s32.totalorder %s23, 0
    %p366 = por %p364, %p365
    %p367 = scmp.ne.s32.totalorder %s356, %s359
    %p368 = scmp.eq.s32.totalorder %s28, 1
    %p369 = por %p367, %p368
    %p370 = scmp.ne.s32.totalorder %s359, %s360
    %p371 = scmp.eq.s32.totalorder %s28, 0
    %p372 = por %p370, %p371
    %p373 = scmp.ne.s32.totalorder %s359, %s360
    %p374 = scmp.eq.s32.totalorder %s29, 1
    %p375 = por %p373, %p374
    %p377 = scmp.ne.s32.totalorder %s360, %s376
    %p378 = scmp.eq.s32.totalorder %s29, 0
    %p379 = por %p377, %p378
    %p380 = scmp.le.s32.totalorder 1, %s23
    %p381 = scmp.lt.s32.totalorder %s23, 3
    %p382 = pnand %p380, %p381
    %p383 = pneg %p382
    // Predicated region
    $region9: #{mine_forward.1} parent=5 // pred_check
      _
    $region10: #{mine_forward.1} parent=5 // pred_check_branch
      %385 = sbr.rel (%p382) target = $region12
    $region11: #{mine_forward.1} parent=5 // pred_region
      %s386 = ssub.s32 %s23, 1
      // Predicated region
      $region13: #{mine_forward.1} parent=11 // pred_check
        %p387 = pneg %p84
      $region14: #{mine_forward.1} parent=11 // pred_check_branch
        %389 = sbr.rel (%p387) target = $region16
      $region15: #{mine_forward.1} parent=11 // pred_region
        _
      $region16: #{mine_forward.1} parent=11 // pred_fallthru
        _
      // Predicated region
      $region17: #{mine_forward.1} parent=11 // pred_check
        %p390 = pneg %p105
      $region18: #{mine_forward.1} parent=11 // pred_check_branch
        %392 = sbr.rel (%p390) target = $region20
      $region19: #{mine_forward.1} parent=11 // pred_region
        _
      $region20: #{mine_forward.1} parent=11 // pred_fallthru
        _
      // Predicated region
      $region21: #{mine_forward.1} parent=11 // pred_check
        %p393 = pneg %p126
      $region22: #{mine_forward.1} parent=11 // pred_check_branch
        %395 = sbr.rel (%p393) target = $region24
      $region23: #{mine_forward.1} parent=11 // pred_region
        _
      $region24: #{mine_forward.1} parent=11 // pred_fallthru
        _
      // Predicated region
      $region25: #{mine_forward.1} parent=11 // pred_check
        %p396 = pneg %p147
      $region26: #{mine_forward.1} parent=11 // pred_check_branch
        %398 = sbr.rel (%p396) target = $region28
      $region27: #{mine_forward.1} parent=11 // pred_region
        _
      $region28: #{mine_forward.1} parent=11 // pred_fallthru
        _
      // Predicated region
      $region29: #{mine_forward.1} parent=11 // pred_check
        %p399 = pneg %p168
      $region30: #{mine_forward.1} parent=11 // pred_check_branch
        %401 = sbr.rel (%p399) target = $region32
      $region31: #{mine_forward.1} parent=11 // pred_region
        _
      $region32: #{mine_forward.1} parent=11 // pred_fallthru
        _
      // Predicated region
      $region33: #{mine_forward.1} parent=11 // pred_check
        %p402 = pneg %p189
      $region34: #{mine_forward.1} parent=11 // pred_check_branch
        %404 = sbr.rel (%p402) target = $region36
      $region35: #{mine_forward.1} parent=11 // pred_region
        _
      $region36: #{mine_forward.1} parent=11 // pred_fallthru
        _
      // Predicated region
      $region37: #{mine_forward.1} parent=11 // pred_check
        %p405 = pneg %p210
      $region38: #{mine_forward.1} parent=11 // pred_check_branch
        %407 = sbr.rel (%p405) target = $region40
      $region39: #{mine_forward.1} parent=11 // pred_region
        _
      $region40: #{mine_forward.1} parent=11 // pred_fallthru
        _
      // Predicated region
      $region41: #{mine_forward.1} parent=11 // pred_check
        %p408 = pneg %p231
      $region42: #{mine_forward.1} parent=11 // pred_check_branch
        %410 = sbr.rel (%p408) target = $region44
      $region43: #{mine_forward.1} parent=11 // pred_region
        _
      $region44: #{mine_forward.1} parent=11 // pred_fallthru
        _
      // Predicated region
      $region45: #{mine_forward.1} parent=11 // pred_check
        %p411 = pneg %p252
      $region46: #{mine_forward.1} parent=11 // pred_check_branch
        %413 = sbr.rel (%p411) target = $region48
      $region47: #{mine_forward.1} parent=11 // pred_region
        _
      $region48: #{mine_forward.1} parent=11 // pred_fallthru
        _
      // Predicated region
      $region49: #{mine_forward.1} parent=11 // pred_check
        %p414 = pneg %p273
      $region50: #{mine_forward.1} parent=11 // pred_check_branch
        %416 = sbr.rel (%p414) target = $region52
      $region51: #{mine_forward.1} parent=11 // pred_region
        _
      $region52: #{mine_forward.1} parent=11 // pred_fallthru
        _
      // Predicated region
      $region53: #{mine_forward.1} parent=11 // pred_check
        %p417 = pneg %p294
      $region54: #{mine_forward.1} parent=11 // pred_check_branch
        %419 = sbr.rel (%p417) target = $region56
      $region55: #{mine_forward.1} parent=11 // pred_region
        _
      $region56: #{mine_forward.1} parent=11 // pred_fallthru
        _
    $region12: #{mine_forward.1} parent=5 // pred_fallthru
      _
    %p420 = scmp.lt.s32.totalorder %s23, 2
    // Predicated region
    $region57: #{mine_forward.1} parent=5 // pred_check
      %p421 = pneg %p420
    $region58: #{mine_forward.1} parent=5 // pred_check_branch
      %423 = sbr.rel (%p421) target = $region60
    $region59: #{mine_forward.1} parent=5 // pred_region
      // Predicated region
      $region61: #{mine_forward.1} parent=59 // pred_check
        %p424 = pneg %p57
      $region62: #{mine_forward.1} parent=59 // pred_check_branch
        %426 = sbr.rel (%p424) target = $region64
      $region63: #{mine_forward.1} parent=59 // pred_region
        %s427 = sadd.s32 %s30, %s31
        %p428 = scmp.lt.s32.totalorder %s427, 1
        %s429 = scalar_select %p428, %s427, 1
        %s430 = smul.addr %s429, 8
        %s431 = scalar_lea.vmem %s0, %s430
        %s432 = sadd.s32 %s30, %s31
      $region64: #{mine_forward.1} parent=59 // pred_fallthru
        _
    $region60: #{mine_forward.1} parent=5 // pred_fallthru
      _
    %p433 = scmp.le.s32.totalorder 1, %s23
    %p434 = scmp.lt.s32.totalorder %s23, 3
    %p435 = pnand %p433, %p434
    %p436 = pneg %p435
    // Predicated region
    $region65: #{mine_forward.1} parent=5 // pred_check
      _
    $region66: #{mine_forward.1} parent=5 // pred_check_branch
      %438 = sbr.rel (%p435) target = $region68
    $region67: #{mine_forward.1} parent=5 // pred_region
      %s439 = ssub.s32 %s23, 1
      %s440 = sadd.s32 %s32, %s33
      %p441 = scmp.lt.s32.totalorder %s440, 1
      %s442 = scalar_select %p441, %s440, 1
      %s443 = smul.addr %s442, 8
      %s444 = scalar_lea.vmem %s0, %s443
      %p445 = pneg %p63
      %p446 = pneg %p60
      %p447 = pneg %p84
      %p448 = pneg %p81
      %p449 = pneg %p105
      %p450 = pneg %p102
      %p451 = pneg %p126
      %p452 = pneg %p123
      %p453 = pneg %p147
      %p454 = pneg %p144
      %p455 = pneg %p168
      %p456 = pneg %p165
      %p457 = pneg %p189
      %p458 = pneg %p186
      %p459 = pneg %p210
      %p460 = pneg %p207
      %p461 = pneg %p231
      %p462 = pneg %p228
      %p463 = pneg %p252
      %p464 = pneg %p249
      %p465 = pneg %p273
      %p466 = pneg %p270
      %p467 = pneg %p294
      %p468 = pneg %p291
      %p469 = pneg %p320
      %p470 = pneg %p317
      %p471 = scmp.lt.s32.totalorder %s32, 1
      %s472 = scalar_select %p471, %s32, 1
      %s473 = smul.addr %s472, 8
      %s474 = scalar_lea.vmem %s12, %s473
      %p475 = pneg %p346
      %p476 = pneg %p343
      %p477 = scmp.lt.s32.totalorder %s32, 1
      %s478 = scalar_select %p477, %s32, 1
      %s479 = smul.addr %s478, 8
      %s480 = scalar_lea.vmem %s13, %s479
      %p481 = pneg %p372
      %p482 = pneg %p369
      %p483 = scmp.lt.s32.totalorder %s32, 1
      %s484 = scalar_select %p483, %s32, 1
      %s485 = smul.addr %s484, 8
      %s486 = scalar_lea.vmem %s14, %s485
      %s487 = sadd.s32 %s32, %s33
      %p488 = scmp.lt.s32.totalorder %s487, 1
      %s489 = scalar_select %p488, %s487, 1
      %s490 = smul.addr %s489, 8
      %s491 = scalar_lea.vmem %s0, %s490
      %s492 = sadd.s32 %s32, %s33
      %p493 = scmp.lt.s32.totalorder %s32, 1
      %s494 = scalar_select %p493, %s32, 1
      %s495 = smul.addr %s494, 8
      %s496 = scalar_lea.vmem %s12, %s495
      %p497 = scmp.lt.s32.totalorder %s32, 1
      %s498 = scalar_select %p497, %s32, 1
      %s499 = smul.addr %s498, 8
      %s500 = scalar_lea.vmem %s13, %s499
      %p501 = scmp.lt.s32.totalorder %s32, 1
      %s502 = scalar_select %p501, %s32, 1
      %s503 = smul.addr %s502, 8
      %s504 = scalar_lea.vmem %s14, %s503
      %p505 = scmp.eq.s32.totalorder %s33, 0
      // Predicated region
      $region69: #{mine_forward.1} parent=67 // pred_check
        %p506 = pneg %p505
      $region70: #{mine_forward.1} parent=67 // pred_check_branch
        %508 = sbr.rel (%p506) target = $region72
      $region71: #{mine_forward.1} parent=67 // pred_region
        %vm509 = vcmask 0
        %510 = vst.msk [vmem:[#allocation2] sm:$0x1] %vm509, 0.0
        %511 = vst.msk [vmem:[#allocation3] sm:$0x1] %vm509, -1e+30
        %512 = vst.msk [vmem:[#allocation4] sm:$0x1] %vm509, 0.0
      $region72: #{mine_forward.1} parent=67 // pred_fallthru
        _
      %v513 = vld [vmem:[%s1] sm:$0xff]
      %v514 = vld [vmem:[%s1 + $0x8] sm:$0xf]
      %v515 = vld [vmem:[%s491] sm:$0xff]
      %v516 = vld [vmem:[%s2] sm:$0x1]
      %v518 = vlaneseq
      %v519 = vshrl.u32 %v518, 7
      %v520 = vsub.s32 0, %v519
      %v521 = vrot.slane %v516, %v520
      %vm523 = vcmask 97280
      %v525 = vsel %vm523, %v515, 0
      %vm527 = vcmask 1043456
      %v529 = vsel %vm527, %v514, 0
      %531 = vmatprep.subr.mxu0 0.0
      %532 = vmatpush1.msra.mxu0 %v513
      %533 = vmatprep.subr.mxu0 0.0
      %534 = vmatpush1.msra.mxu0 %v529
      %535 = vmatprep.subr.mxu0 0.0
      %536 = vmatpush1.msra.mxu0 0.0
      %537 = vmatprep.subr.mxu0 0.0
      %538 = vmatpush1.msra.mxu0 0.0
      %539 = vmatprep.subr.mxu0 0.0
      %540 = vmatpush1.msra.mxu0 0.0
      %541 = vmatprep.subr.mxu0 0.0
      %542 = vmatpush1.msra.mxu0 0.0
      %543 = vmatprep.subr.mxu0 0.0
      %544 = vmatpush1.msra.mxu0 0.0
      %545 = vmatprep.subr.mxu0 0.0
      %546 = vmatpush1.msra.mxu0 0.0
      %547 = vmatprep.subr.mxu0 0.0
      %548 = vmatpush1.msra.mxu0 0.0
      %549 = vmatprep.subr.mxu0 0.0
      %550 = vmatpush1.msra.mxu0 0.0
      %551 = vmatprep.subr.mxu0 0.0
      %552 = vmatpush1.msra.mxu0 0.0
      %553 = vmatprep.subr.mxu0 0.0
      %554 = vmatpush1.msra.mxu0 0.0
      %555 = vmatprep.subr.mxu0 0.0
      %556 = vmatpush1.msra.mxu0 0.0
      %557 = vmatprep.subr.mxu0 0.0
      %558 = vmatpush1.msra.mxu0 0.0
      %559 = vmatprep.subr.mxu0 0.0
      %560 = vmatpush1.msra.mxu0 0.0
      %561 = vmatprep.subr.mxu0 0.0
      %562 = vmatpush1.msra.mxu0 0.0
      %563 = vmatprep.subr.mxu0 0.0
      %564 = vmatpush1.msra.mxu0 0.0
      %565 = vmatprep.subr.mxu0 0.0
      %566 = vmatpush1.msra.mxu0 0.0
      %567 = vmatprep.subr.mxu0 0.0
      %568 = vmatpush1.msra.mxu0 0.0
      %569 = vmatprep.subr.mxu0 0.0
      %570 = vmatpush1.msra.mxu0 0.0
      %571 = vmatprep.subr.mxu0 0.0
      %572 = vmatpush1.msra.mxu0 0.0
      %573 = vmatprep.subr.mxu0 0.0
      %574 = vmatpush1.msra.mxu0 0.0
      %575 = vmatprep.subr.mxu0 0.0
      %576 = vmatpush1.msra.mxu0 0.0
      %577 = vmatprep.subr.mxu0 0.0
      %578 = vmatpush1.msra.mxu0 0.0
      %579 = vmatprep.subr.mxu0 0.0
      %580 = vmatpush1.msra.mxu0 0.0
      %581 = vmatprep.subr.mxu0 0.0
      %582 = vmatpush1.msra.mxu0 0.0
      %583 = vmatprep.subr.mxu0 0.0
      %584 = vmatpush1.msra.mxu0 0.0
      %585 = vmatprep.subr.mxu0 0.0
      %586 = vmatpush1.msra.mxu0 0.0
      %587 = vmatprep.subr.mxu0 0.0
      %588 = vmatpush1.msra.mxu0 0.0
      %589 = vmatprep.subr.mxu0 0.0
      %590 = vmatpush1.msra.mxu0 0.0
      %591 = vmatprep.subr.mxu0 0.0
      %592 = vmatpush1.msra.mxu0 0.0
      %593 = vmatprep.subr.mxu0 0.0
      %594 = vmatpush1.msra.mxu0 0.0
      %595 = vmatprep.mubr.f32.mxu0 0.0
      %596 = vmatmul.mubr.f32.gmra.mrb[0].mxu0 %v525
      %v597 = vpop.f32.mrb[0].mxu0
      %v598 = vadd.f32 %v521, %v597
      %v599 = vpop.f32.mrb[0].mxu0
      %600 = vdwg.mxu0
      %v601 = vmul.f32 %v598, %v598
      %v602 = vmul.f32 %v598, %v601
      %v603 = vmul.f32 %v602, 0.044715
      %v604 = vadd.f32 %v598, %v603
      %v605 = vmul.f32 %v604, 0.7978846
      %v606 = vtanh.pop %v605
      %v607 = vadd.f32 %v606, 1.0
      %v608 = vmul.f32 %v607, 0.5
      %v609 = vmul.f32 %v598, %v608
      %v610 = vld [vmem:[%s3] sm:$0xff]
      %v611 = vld [vmem:[%s3 + $0x8] sm:$0xff]
      %v612 = vld [vmem:[%s3 + $0x10] sm:$0xff]
      %v613 = vld [vmem:[%s3 + $0x18] sm:$0xff]
      %v614 = vld [vmem:[%s3 + $0x20] sm:$0xff]
      %v615 = vld [vmem:[%s3 + $0x28] sm:$0xff]
      %v616 = vld [vmem:[%s3 + $0x30] sm:$0xff]
      %v617 = vld [vmem:[%s3 + $0x38] sm:$0xff]
      %v618 = vld [vmem:[%s3 + $0x40] sm:$0xff]
      %v619 = vld [vmem:[%s3 + $0x48] sm:$0xff]
      %v620 = vld [vmem:[%s3 + $0x50] sm:$0xff]
      %v621 = vld [vmem:[%s3 + $0x58] sm:$0xff]
      %v622 = vld [vmem:[%s3 + $0x60] sm:$0xff]
      %v623 = vld [vmem:[%s3 + $0x68] sm:$0xff]
      %v624 = vld [vmem:[%s3 + $0x70] sm:$0xff]
      %v625 = vld [vmem:[%s3 + $0x78] sm:$0xff]
      %v626 = vld [vmem:[%s6] sm:$0x1]
      %v628 = vlaneseq
      %v629 = vshrl.u32 %v628, 7
      %v630 = vsub.s32 0, %v629
      %v631 = vrot.slane %v626, %v630
      %633 = vmatprep.subr.mxu0 0.0
      %634 = vmatpush1.msra.mxu0 %v610
      %635 = vmatprep.subr.mxu0 0.0
      %636 = vmatpush1.msra.mxu0 %v611
      %637 = vmatprep.subr.mxu0 0.0
      %638 = vmatpush1.msra.mxu0 %v612
      %639 = vmatprep.subr.mxu0 0.0
      %640 = vmatpush1.msra.mxu0 %v613
      %641 = vmatprep.subr.mxu0 0.0
      %642 = vmatpush1.msra.mxu0 %v614
      %643 = vmatprep.subr.mxu0 0.0
      %644 = vmatpush1.msra.mxu0 %v615
      %645 = vmatprep.subr.mxu0 0.0
      %646 = vmatpush1.msra.mxu0 %v616
      %647 = vmatprep.subr.mxu0 0.0
      %648 = vmatpush1.msra.mxu0 %v617
      %649 = vmatprep.subr.mxu0 0.0
      %650 = vmatpush1.msra.mxu0 %v618
      %651 = vmatprep.subr.mxu0 0.0
      %652 = vmatpush1.msra.mxu0 %v619
      %653 = vmatprep.subr.mxu0 0.0
      %654 = vmatpush1.msra.mxu0 %v620
      %655 = vmatprep.subr.mxu0 0.0
      %656 = vmatpush1.msra.mxu0 %v621
      %657 = vmatprep.subr.mxu0 0.0
      %658 = vmatpush1.msra.mxu0 %v622
      %659 = vmatprep.subr.mxu0 0.0
      %660 = vmatpush1.msra.mxu0 %v623
      %661 = vmatprep.subr.mxu0 0.0
      %662 = vmatpush1.msra.mxu0 %v624
      %663 = vmatprep.subr.mxu0 0.0
      %664 = vmatpush1.msra.mxu0 %v625
      %665 = vmatprep.subr.mxu0 0.0
      %666 = vmatpush1.msra.mxu0 0.0
      %667 = vmatprep.subr.mxu0 0.0
      %668 = vmatpush1.msra.mxu0 0.0
      %669 = vmatprep.subr.mxu0 0.0
      %670 = vmatpush1.msra.mxu0 0.0
      %671 = vmatprep.subr.mxu0 0.0
      %672 = vmatpush1.msra.mxu0 0.0
      %673 = vmatprep.subr.mxu0 0.0
      %674 = vmatpush1.msra.mxu0 0.0
      %675 = vmatprep.subr.mxu0 0.0
      %676 = vmatpush1.msra.mxu0 0.0
      %677 = vmatprep.subr.mxu0 0.0
      %678 = vmatpush1.msra.mxu0 0.0
      %679 = vmatprep.subr.mxu0 0.0
      %680 = vmatpush1.msra.mxu0 0.0
      %681 = vmatprep.subr.mxu0 0.0
      %682 = vmatpush1.msra.mxu0 0.0
      %683 = vmatprep.subr.mxu0 0.0
      %684 = vmatpush1.msra.mxu0 0.0
      %685 = vmatprep.subr.mxu0 0.0
      %686 = vmatpush1.msra.mxu0 0.0
      %687 = vmatprep.subr.mxu0 0.0
      %688 = vmatpush1.msra.mxu0 0.0
      %689 = vmatprep.subr.mxu0 0.0
      %690 = vmatpush1.msra.mxu0 0.0
      %691 = vmatprep.subr.mxu0 0.0
      %692 = vmatpush1.msra.mxu0 0.0
      %693 = vmatprep.subr.mxu0 0.0
      %694 = vmatpush1.msra.mxu0 0.0
      %695 = vmatprep.subr.mxu0 0.0
      %696 = vmatpush1.msra.mxu0 0.0
      %697 = vmatprep.mubr.f32.mxu0 0.0
      %698 = vmatmul.mubr.f32.gmra.mrb[0].mxu0 %v609
      %v699 = vpop.f32.mrb[0].mxu0
      %v700 = vadd.f32 %v631, %v699
      %v701 = vpop.f32.mrb[0].mxu0
      %702 = vdwg.mxu0
      %v703 = vmul.f32 %v700, %v700
      %v704 = vmul.f32 %v700, %v703
      %v705 = vmul.f32 %v704, 0.044715
      %v706 = vadd.f32 %v700, %v705
      %v707 = vmul.f32 %v706, 0.7978846
      %v708 = vtanh.pop %v707
      %v709 = vadd.f32 %v708, 1.0
      %v710 = vmul.f32 %v709, 0.5
      %v711 = vmul.f32 %v700, %v710
      %v712 = vld [vmem:[%s4] sm:$0xff]
      %v713 = vld [vmem:[%s4 + $0x8] sm:$0xff]
      %v714 = vld [vmem:[%s4 + $0x10] sm:$0xff]
      %v715 = vld [vmem:[%s4 + $0x18] sm:$0xff]
      %v716 = vld [vmem:[%s4 + $0x20] sm:$0xff]
      %v717 = vld [vmem:[%s4 + $0x28] sm:$0xff]
      %v718 = vld [vmem:[%s4 + $0x30] sm:$0xff]
      %v719 = vld [vmem:[%s4 + $0x38] sm:$0xff]
      %v720 = vld [vmem:[%s7] sm:$0x1]
      %v722 = vlaneseq
      %v723 = vshrl.u32 %v722, 7
      %v724 = vsub.s32 0, %v723
      %v725 = vrot.slane %v720, %v724
      %vm727 = vcmask 523264
      %v729 = vsel %vm727, %v711, 0
      %731 = vmatprep.subr.mxu0 0.0
      %732 = vmatpush1.msra.mxu0 %v712
      %733 = vmatprep.subr.mxu0 0.0
      %734 = vmatpush1.msra.mxu0 %v713
      %735 = vmatprep.subr.mxu0 0.0
      %736 = vmatpush1.msra.mxu0 %v714
      %737 = vmatprep.subr.mxu0 0.0
      %738 = vmatpush1.msra.mxu0 %v715
      %739 = vmatprep.subr.mxu0 0.0
      %740 = vmatpush1.msra.mxu0 %v716
      %741 = vmatprep.subr.mxu0 0.0
      %742 = vmatpush1.msra.mxu0 %v717
      %743 = vmatprep.subr.mxu0 0.0
      %744 = vmatpush1.msra.mxu0 %v718
      %745 = vmatprep.subr.mxu0 0.0
      %746 = vmatpush1.msra.mxu0 %v719
      %747 = vmatprep.subr.mxu0 0.0
      %748 = vmatpush1.msra.mxu0 0.0
      %749 = vmatprep.subr.mxu0 0.0
      %750 = vmatpush1.msra.mxu0 0.0
      %751 = vmatprep.subr.mxu0 0.0
      %752 = vmatpush1.msra.mxu0 0.0
      %753 = vmatprep.subr.mxu0 0.0
      %754 = vmatpush1.msra.mxu0 0.0
      %755 = vmatprep.subr.mxu0 0.0
      %756 = vmatpush1.msra.mxu0 0.0
      %757 = vmatprep.subr.mxu0 0.0
      %758 = vmatpush1.msra.mxu0 0.0
      %759 = vmatprep.subr.mxu0 0.0
      %760 = vmatpush1.msra.mxu0 0.0
      %761 = vmatprep.subr.mxu0 0.0
      %762 = vmatpush1.msra.mxu0 0.0
      %763 = vmatprep.subr.mxu0 0.0
      %764 = vmatpush1.msra.mxu0 0.0
      %765 = vmatprep.subr.mxu0 0.0
      %766 = vmatpush1.msra.mxu0 0.0
      %767 = vmatprep.subr.mxu0 0.0
      %768 = vmatpush1.msra.mxu0 0.0
      %769 = vmatprep.subr.mxu0 0.0
      %770 = vmatpush1.msra.mxu0 0.0
      %771 = vmatprep.subr.mxu0 0.0
      %772 = vmatpush1.msra.mxu0 0.0
      %773 = vmatprep.subr.mxu0 0.0
      %774 = vmatpush1.msra.mxu0 0.0
      %775 = vmatprep.subr.mxu0 0.0
      %776 = vmatpush1.msra.mxu0 0.0
      %777 = vmatprep.subr.mxu0 0.0
      %778 = vmatpush1.msra.mxu0 0.0
      %779 = vmatprep.subr.mxu0 0.0
      %780 = vmatpush1.msra.mxu0 0.0
      %781 = vmatprep.subr.mxu0 0.0
      %782 = vmatpush1.msra.mxu0 0.0
      %783 = vmatprep.subr.mxu0 0.0
      %784 = vmatpush1.msra.mxu0 0.0
      %785 = vmatprep.subr.mxu0 0.0
      %786 = vmatpush1.msra.mxu0 0.0
      %787 = vmatprep.subr.mxu0 0.0
      %788 = vmatpush1.msra.mxu0 0.0
      %789 = vmatprep.subr.mxu0 0.0
      %790 = vmatpush1.msra.mxu0 0.0
      %791 = vmatprep.subr.mxu0 0.0
      %792 = vmatpush1.msra.mxu0 0.0
      %793 = vmatprep.subr.mxu0 0.0
      %794 = vmatpush1.msra.mxu0 0.0
      %795 = vmatprep.mubr.f32.mxu0 0.0
      %796 = vmatmul.mubr.f32.gmra.mrb[0].mxu0 %v729
      %v797 = vpop.f32.mrb[0].mxu0
      %v798 = vadd.f32 %v725, %v797
      %v799 = vpop.f32.mrb[0].mxu0
      %800 = vdwg.mxu0
      %v801 = vmul.f32 %v798, %v798
      %v802 = vmul.f32 %v798, %v801
      %v803 = vmul.f32 %v802, 0.044715
      %v804 = vadd.f32 %v798, %v803
      %v805 = vmul.f32 %v804, 0.7978846
      %v806 = vtanh.pop %v805
      %v807 = vadd.f32 %v806, 1.0
      %v808 = vmul.f32 %v807, 0.5
      %v809 = vmul.f32 %v798, %v808
      %v810 = vld [vmem:[%s5] sm:$0xff]
      %v811 = vld [vmem:[%s5 + $0x8] sm:$0xff]
      %v812 = vld [vmem:[%s5 + $0x10] sm:$0xff]
      %v813 = vld [vmem:[%s5 + $0x18] sm:$0xff]
      %v814 = vld [vmem:[%s8] sm:$0x1]
      %v816 = vlaneseq
      %v817 = vshrl.u32 %v816, 7
      %v818 = vsub.s32 0, %v817
      %v819 = vrot.slane %v814, %v818
      %vm821 = vcmask 261120
      %v823 = vsel %vm821, %v809, 0
      %825 = vmatprep.subr.mxu0 0.0
      %826 = vmatpush1.msra.mxu0 %v810
      %827 = vmatprep.subr.mxu0 0.0
      %828 = vmatpush1.msra.mxu0 %v811
      %829 = vmatprep.subr.mxu0 0.0
      %830 = vmatpush1.msra.mxu0 %v812
      %831 = vmatprep.subr.mxu0 0.0
      %832 = vmatpush1.msra.mxu0 %v813
      %833 = vmatprep.subr.mxu0 0.0
      %834 = vmatpush1.msra.mxu0 0.0
      %835 = vmatprep.subr.mxu0 0.0
      %836 = vmatpush1.msra.mxu0 0.0
      %837 = vmatprep.subr.mxu0 0.0
      %838 = vmatpush1.msra.mxu0 0.0
      %839 = vmatprep.subr.mxu0 0.0
      %840 = vmatpush1.msra.mxu0 0.0
      %841 = vmatprep.subr.mxu0 0.0
      %842 = vmatpush1.msra.mxu0 0.0
      %843 = vmatprep.subr.mxu0 0.0
      %844 = vmatpush1.msra.mxu0 0.0
      %845 = vmatprep.subr.mxu0 0.0
      %846 = vmatpush1.msra.mxu0 0.0
      %847 = vmatprep.subr.mxu0 0.0
      %848 = vmatpush1.msra.mxu0 0.0
      %849 = vmatprep.subr.mxu0 0.0
      %850 = vmatpush1.msra.mxu0 0.0
      %851 = vmatprep.subr.mxu0 0.0
      %852 = vmatpush1.msra.mxu0 0.0
      %853 = vmatprep.subr.mxu0 0.0
      %854 = vmatpush1.msra.mxu0 0.0
      %855 = vmatprep.subr.mxu0 0.0
      %856 = vmatpush1.msra.mxu0 0.0
      %857 = vmatprep.subr.mxu0 0.0
      %858 = vmatpush1.msra.mxu0 0.0
      %859 = vmatprep.subr.mxu0 0.0
      %860 = vmatpush1.msra.mxu0 0.0
      %861 = vmatprep.subr.mxu0 0.0
      %862 = vmatpush1.msra.mxu0 0.0
      %863 = vmatprep.subr.mxu0 0.0
      %864 = vmatpush1.msra.mxu0 0.0
      %865 = vmatprep.subr.mxu0 0.0
      %866 = vmatpush1.msra.mxu0 0.0
      %867 = vmatprep.subr.mxu0 0.0
      %868 = vmatpush1.msra.mxu0 0.0
      %869 = vmatprep.subr.mxu0 0.0
      %870 = vmatpush1.msra.mxu0 0.0
      %871 = vmatprep.subr.mxu0 0.0
      %872 = vmatpush1.msra.mxu0 0.0
      %873 = vmatprep.subr.mxu0 0.0
      %874 = vmatpush1.msra.mxu0 0.0
      %875 = vmatprep.subr.mxu0 0.0
      %876 = vmatpush1.msra.mxu0 0.0
      %877 = vmatprep.subr.mxu0 0.0
      %878 = vmatpush1.msra.mxu0 0.0
      %879 = vmatprep.subr.mxu0 0.0
      %880 = vmatpush1.msra.mxu0 0.0
      %881 = vmatprep.subr.mxu0 0.0
      %882 = vmatpush1.msra.mxu0 0.0
      %883 = vmatprep.subr.mxu0 0.0
      %884 = vmatpush1.msra.mxu0 0.0
      %885 = vmatprep.subr.mxu0 0.0
      %886 = vmatpush1.msra.mxu0 0.0
      %887 = vmatprep.subr.mxu0 0.0
      %888 = vmatpush1.msra.mxu0 0.0
      %889 = vmatprep.mubr.f32.mxu0 0.0
      %890 = vmatmul.mubr.f32.gmra.mrb[0].mxu0 %v823
      %v891 = vpop.f32.mrb[0].mxu0
      %v892 = vadd.f32 %v819, %v891
      %v893 = vpop.f32.mrb[0].mxu0
      %894 = vdwg.mxu0
      %v895 = vmul.f32 %v892, %v892
      %v896 = vmul.f32 %v892, %v895
      %v897 = vmul.f32 %v896, 0.044715
      %v898 = vadd.f32 %v892, %v897
      %v899 = vmul.f32 %v898, 0.7978846
      %v900 = vtanh.pop %v899
      %v901 = vadd.f32 %v900, 1.0
      %v902 = vmul.f32 %v901, 0.5
      %v903 = vmul.f32 %v892, %v902
      %s904 = sadd.s32 %s32, %s33
      %s905 = smul.u32 %s904, 8
      %v906 = vlaneseq
      %v907 = vshrl.u32 %v906, 7
      %v908 = vstv %s905
      %v909 = vadd.s32 %v908, %v907
      %vm910 = vcmp.lt.s32.totalorder %v909, 8
      %v911 = vsel %vm910, 1, 0
      %vm912 = vcmp.eq.s32.totalorder %v911, 1
      %v913 = vsel %vm912, %v903, 0.0
      %vm914 = vcmask 130048
      %v915 = vsel %vm914, %v913, 0.0
      %v916 = vrot.slane %v915, 4
      %v917 = vadd.f32 %v915, %v916
      %v918 = vrot.slane %v917, 2
      %v919 = vadd.f32 %v917, %v918
      %v920 = vrot.slane %v919, 1
      %v921 = vadd.f32 %v919, %v920
      %v922 = vcvt.s32.f32 %v911
      %v923 = vrot.slane %v922, 4
      %v924 = vadd.f32 %v922, %v923
      %v925 = vrot.slane %v924, 2
      %v926 = vadd.f32 %v924, %v925
      %v927 = vrot.slane %v926, 1
      %v928 = vadd.f32 %v926, %v927
      %v929 = vld [vmem:[#allocation2] sm:$0x1]
      %v930 = vld [vmem:[%s9] sm:$0x1]
      %v931 = vmul.f32 %v921, %v930
      %vm932 = vcmask 122880
      %v933 = vsel %vm932, %v931, 0.0
      %934 = vadd.xlane.f32.xlu0 %v933
      %v935 = vpop.xlane.xlu0 %934
      %v936 = vld [vmem:[#allocation5] sm:$0x1]
      %v937 = vmul.f32 %v928, %v936
      %v938 = vadd.f32 %v935, %v937
      %v939 = vadd.f32 %v929, %v938
      %vm940 = vcmask 0
      %941 = vst.msk [vmem:[#allocation2] sm:$0x1] %vm940, %v939
      %v942 = vld [vmem:[%s10] sm:$0x1]
      %v944 = vlaneseq
      %v945 = vshrl.u32 %v944, 7
      %v946 = vsub.s32 0, %v945
      %v947 = vrot.slane %v942, %v946
      %v949 = vmul.f32 %v903, %v947
      %v950 = vsel %vm914, %v949, 0.0
      %951 = vadd.xlane.f32.xlu0 %v950
      %v952 = vpop.xlane.xlu0 %951
      %v953 = vld [vmem:[#allocation5] sm:$0x1]
      %v955 = vlaneseq
      %v956 = vshrl.u32 %v955, 7
      %v957 = vsub.s32 0, %v956
      %v958 = vrot.slane %v953, %v957
      %v960 = vadd.f32 %v952, %v958
      %v961 = vsel %vm910, %v960, -1e+30
      %vm962 = vcmask 7168
      %v963 = vsel %vm962, %v961, -inf
      %v964 = vrot.slane %v963, 4
      %v965 = vmax.f32 %v963, %v964
      %v966 = vrot.slane %v965, 2
      %v967 = vmax.f32 %v965, %v966
      %v968 = vrot.slane %v967, 1
      %v969 = vmax.f32 %v967, %v968
      %v970 = vld [vmem:[#allocation3] sm:$0x1]
      %v971 = vmax.f32 %v970, %v969
      %v972 = vld [vmem:[#allocation4] sm:$0x1]
      %v973 = vsub.f32 %v970, %v971
      %v974 = vmul.f32 %v973, 1.442695
      %v975 = vpow.pop %v974
      %v976 = vmul.f32 %v972, %v975
      %v978 = vlaneseq
      %v979 = vshrl.u32 %v978, 7
      %v980 = vsub.s32 0, %v979
      %v981 = vrot.slane %v971, %v980
      %v983 = vsub.f32 %v961, %v981
      %v984 = vmul.f32 %v983, 1.442695
      %v985 = vpow.pop %v984
      %v986 = vsel %vm962, %v985, 0.0
      %v987 = vrot.slane %v986, 4
      %v988 = vadd.f32 %v986, %v987
      %v989 = vrot.slane %v988, 2
      %v990 = vadd.f32 %v988, %v989
      %v991 = vrot.slane %v990, 1
      %v992 = vadd.f32 %v990, %v991
      %v993 = vadd.f32 %v976, %v992
      %994 = vst.msk [vmem:[#allocation4] sm:$0x1] %vm940, %v993
      %995 = vst.msk [vmem:[#allocation3] sm:$0x1] %vm940, %v971
      // Predicated region
      $region73: #{mine_forward.1} parent=67 // pred_check
        %p996 = pneg %p505
      $region74: #{mine_forward.1} parent=67 // pred_check_branch
        %998 = sbr.rel (%p996) target = $region76
      $region75: #{mine_forward.1} parent=67 // pred_region
        %v999 = vld [vmem:[#allocation2] sm:$0x1]
        %v1001 = vlaneseq
        %v1002 = vshrl.u32 %v1001, 7
        %v1003 = vsub.s32 0, %v1002
        %v1004 = vrot.slane %v999, %v1003
        %1005 = vset.pattern.permute.xlu0 0
        %1006 = vperm.xlu0 %1005, %v1004
        %v1007 = vpop.permute.xlu0 %1006
        %1009 = vst [vmem:[%s496] sm:$0xff] %v1007
        %v1010 = vld [vmem:[#allocation3] sm:$0x1]
        %v1012 = vlaneseq
        %v1013 = vshrl.u32 %v1012, 7
        %v1014 = vsub.s32 0, %v1013
        %v1015 = vrot.slane %v1010, %v1014
        %1016 = vset.pattern.permute.xlu0 0
        %1017 = vperm.xlu0 %1016, %v1015
        %v1018 = vpop.permute.xlu0 %1017
        %1020 = vst [vmem:[%s500] sm:$0xff] %v1018
        %v1021 = vld [vmem:[#allocation4] sm:$0x1]
        %v1023 = vlaneseq
        %v1024 = vshrl.u32 %v1023, 7
        %v1025 = vsub.s32 0, %v1024
        %v1026 = vrot.slane %v1021, %v1025
        %1027 = vset.pattern.permute.xlu0 0
        %1028 = vperm.xlu0 %1027, %v1026
        %v1029 = vpop.permute.xlu0 %1028
        %1031 = vst [vmem:[%s504] sm:$0xff] %v1029
      $region76: #{mine_forward.1} parent=67 // pred_fallthru
        _
      %p1032 = scmp.lt.s32.totalorder %s32, 1
      %s1033 = scalar_select %p1032, %s32, 1
      %s1034 = smul.addr %s1033, 8
      %s1035 = scalar_lea.vmem %s12, %s1034
      %p1036 = scmp.lt.s32.totalorder %s32, 1
      %s1037 = scalar_select %p1036, %s32, 1
      %s1038 = smul.addr %s1037, 8
      %s1039 = scalar_lea.vmem %s13, %s1038
      %p1040 = scmp.lt.s32.totalorder %s32, 1
      %s1041 = scalar_select %p1040, %s32, 1
      %s1042 = smul.addr %s1041, 8
      %s1043 = scalar_lea.vmem %s14, %s1042
      // Predicated region
      $region77: #{mine_forward.1} parent=67 // pred_check
        %p1044 = pneg %p317
      $region78: #{mine_forward.1} parent=67 // pred_check_branch
        %1046 = sbr.rel (%p1044) target = $region80
      $region79: #{mine_forward.1} parent=67 // pred_region
        _
      $region80: #{mine_forward.1} parent=67 // pred_fallthru
        _
      // Predicated region
      $region81: #{mine_forward.1} parent=67 // pred_check
        %p1047 = pneg %p343
      $region82: #{mine_forward.1} parent=67 // pred_check_branch
        %1049 = sbr.rel (%p1047) target = $region84
      $region83: #{mine_forward.1} parent=67 // pred_region
        _
      $region84: #{mine_forward.1} parent=67 // pred_fallthru
        _
      // Predicated region
      $region85: #{mine_forward.1} parent=67 // pred_check
        %p1050 = pneg %p369
      $region86: #{mine_forward.1} parent=67 // pred_check_branch
        %1052 = sbr.rel (%p1050) target = $region88
      $region87: #{mine_forward.1} parent=67 // pred_region
        _
      $region88: #{mine_forward.1} parent=67 // pred_fallthru
        _
    $region68: #{mine_forward.1} parent=5 // pred_fallthru
      _
    %p1053 = scmp.le.s32.totalorder 2, %s23
    // Predicated region
    $region89: #{mine_forward.1} parent=5 // pred_check
      %p1054 = pneg %p1053
    $region90: #{mine_forward.1} parent=5 // pred_check_branch
      %1056 = sbr.rel (%p1054) target = $region92
    $region91: #{mine_forward.1} parent=5 // pred_region
      %s1057 = ssub.s32 %s23, 2
      // Predicated region
      $region93: #{mine_forward.1} parent=91 // pred_check
        %p1058 = pneg %p323
      $region94: #{mine_forward.1} parent=91 // pred_check_branch
        %1060 = sbr.rel (%p1058) target = $region96
      $region95: #{mine_forward.1} parent=91 // pred_region
        %p1061 = scmp.lt.s32.totalorder %s34, 1
        %s1062 = scalar_select %p1061, %s34, 1
        %s1063 = smul.addr %s1062, 8
        %s1064 = scalar_lea.vmem %s12, %s1063
      $region96: #{mine_forward.1} parent=91 // pred_fallthru
        _
      // Predicated region
      $region97: #{mine_forward.1} parent=91 // pred_check
        %p1065 = pneg %p349
      $region98: #{mine_forward.1} parent=91 // pred_check_branch
        %1067 = sbr.rel (%p1065) target = $region100
      $region99: #{mine_forward.1} parent=91 // pred_region
        %p1068 = scmp.lt.s32.totalorder %s34, 1
        %s1069 = scalar_select %p1068, %s34, 1
        %s1070 = smul.addr %s1069, 8
        %s1071 = scalar_lea.vmem %s13, %s1070
      $region100: #{mine_forward.1} parent=91 // pred_fallthru
        _
      // Predicated region
      $region101: #{mine_forward.1} parent=91 // pred_check
        %p1072 = pneg %p375
      $region102: #{mine_forward.1} parent=91 // pred_check_branch
        %1074 = sbr.rel (%p1072) target = $region104
      $region103: #{mine_forward.1} parent=91 // pred_region
        %p1075 = scmp.lt.s32.totalorder %s34, 1
        %s1076 = scalar_select %p1075, %s34, 1
        %s1077 = smul.addr %s1076, 8
        %s1078 = scalar_lea.vmem %s14, %s1077
      $region104: #{mine_forward.1} parent=91 // pred_fallthru
        _
    $region92: #{mine_forward.1} parent=5 // pred_fallthru
      _
  $region6: #{mine_forward.1} parent=0 // loop_footer
    %s27 = sadd.s32 1, %s23
  $region7: #{mine_forward.1} parent=0 // loop_footer_branch
    %22 = sbr.rel target = $region3
  $region8: #{mine_forward.1} parent=0 // loop_exit
    _

</llo_original>
